<compile_context>
chip_gen: v7x
topology: tpu7x:2x2x1
jax: 0.10.0
libtpu: 0.0.40
codegen_flags: <defaults>
</compile_context>

<pallas_src>
import functools
import numpy as np
import jax
import jax.numpy as jnp
from jax import lax
from jax.experimental import pallas as pl
from jax.experimental.pallas import tpu as pltpu

EPS = 1e-5
T_BLK = 16          # max timesteps per recurrent grid step
SUBLANE = 8


def _round_up(n, m):
    return ((n + m - 1) // m) * m


def _row_tile(n):
    for cand in (1024, 512, 256, 128, 64, 32, 16, 8):
        if n % cand == 0:
            return cand
    return n


# --------------- pass 1: masked BatchNorm statistics (tiled reduction) --------------
def bn_stats_kernel(x_ref, m_ref, sum_ref, sq_ref):
    @pl.when(pl.program_id(0) == 0)
    def _():
        sum_ref[...] = jnp.zeros_like(sum_ref)
        sq_ref[...] = jnp.zeros_like(sq_ref)

    x = x_ref[...]                      # (R, D)
    m = m_ref[...]                      # (R, 1) validity mask (0/1)
    xm = x * m
    sum_ref[...] += jnp.sum(xm, axis=0, keepdims=True)
    sq_ref[...] += jnp.sum(xm * x, axis=0, keepdims=True)


def bn_stats(x2d, m2d):
    n, d = x2d.shape
    r = _row_tile(n)
    grid_spec = pltpu.PrefetchScalarGridSpec(
        num_scalar_prefetch=0,
        grid=(n // r,),
        in_specs=[
            pl.BlockSpec((r, d), lambda i: (i, 0)),
            pl.BlockSpec((r, 1), lambda i: (i, 0)),
        ],
        out_specs=[
            pl.BlockSpec((1, d), lambda i: (0, 0)),
            pl.BlockSpec((1, d), lambda i: (0, 0)),
        ],
    )
    return pl.pallas_call(
        bn_stats_kernel,
        out_shape=(jax.ShapeDtypeStruct((1, d), jnp.float32),
                   jax.ShapeDtypeStruct((1, d), jnp.float32)),
        grid_spec=grid_spec,
        compiler_params=pltpu.CompilerParams(dimension_semantics=("arbitrary",)),
    )(x2d, m2d)


# ------- pass 2: fused (BN-folded input projection + LSTM recurrence) kernel --------
def lstm_kernel(x_ref, m_ref, wih_ref, b_ref, whh_ref, o_ref,
                gx_scr, h_scr, c_scr, *, t_blk):
    # x_ref   : (t_blk*B_pad, D)   input slab for this block of timesteps
    # m_ref   : (t_blk*B_pad, 1)   validity mask (packed-sequence state freeze)
    # wih_ref : (D, 4H) bf16       BN-scale-folded input weights (VMEM resident)
    # b_ref   : (1, 4H)  f32       BN-shift-folded bias
    # whh_ref : (H, 4H)  f32       recurrent weights (VMEM resident)
    # o_ref   : (t_blk*B_pad, H)   output slab
    b_pad, hdim = h_scr.shape

    @pl.when(pl.program_id(0) == 0)
    def _():
        h_scr[...] = jnp.zeros_like(h_scr)
        c_scr[...] = jnp.zeros_like(c_scr)

    # Hoisted input projection for ALL t_blk timesteps in this block: one bf16 MXU
    # matmul, staged in VMEM scratch (gates never round-trip through HBM).
    x_b = x_ref[...].astype(jnp.bfloat16)                               # (t_blk*B, D)
    gx_scr[...] = (jnp.dot(x_b, wih_ref[...],
                           preferred_element_type=jnp.float32) + b_ref[...])

    whh = whh_ref[...]                  # (H, 4H), fetched once (constant index_map)
    h = h_scr[...]
    c = c_scr[...]
    for tt in range(t_blk):             # static unroll: all slice starts are constant
        row = pl.ds(tt * b_pad, b_pad)
        g = gx_scr[row, :] + jnp.dot(h, whh, preferred_element_type=jnp.float32)
        i_g = jax.nn.sigmoid(g[:, 0:hdim])
        f_g = jax.nn.sigmoid(g[:, hdim:2 * hdim])
        g_g = jnp.tanh(g[:, 2 * hdim:3 * hdim])
        o_g = jax.nn.sigmoid(g[:, 3 * hdim:4 * hdim])
        c_new = f_g * c + i_g * g_g
        h_new = o_g * jnp.tanh(c_new)
        keep = m_ref[row, :] > 0.0       # (B_pad, 1): packed-sequence state freeze
        h = jnp.where(keep, h_new, h)
        c = jnp.where(keep, c_new, c)
        o_ref[row, :] = jnp.where(keep, h_new, 0.0).astype(o_ref.dtype)
    h_scr[...] = h
    c_scr[...] = c


def lstm_fused(x2d, m2d, wih_bf16, b_eff, whh_t, b_pad, t_blk):
    n, d = x2d.shape
    g4h = wih_bf16.shape[1]
    hdim = whh_t.shape[0]
    rows = t_blk * b_pad
    grid_spec = pltpu.PrefetchScalarGridSpec(
        num_scalar_prefetch=0,
        grid=(n // rows,),
        in_specs=[
            pl.BlockSpec((rows, d), lambda t: (t, 0)),
            pl.BlockSpec((rows, 1), lambda t: (t, 0)),
            pl.BlockSpec((d, g4h), lambda t: (0, 0)),      # W_ih_eff resident in VMEM
            pl.BlockSpec((1, g4h), lambda t: (0, 0)),      # b_eff   resident in VMEM
            pl.BlockSpec((hdim, g4h), lambda t: (0, 0)),   # W_hh    resident in VMEM
        ],
        out_specs=pl.BlockSpec((rows, hdim), lambda t: (t, 0)),
        scratch_shapes=[
            pltpu.VMEM((rows, g4h), jnp.float32),          # staged input-projection gates
            pltpu.VMEM((b_pad, hdim), jnp.float32),        # h state
            pltpu.VMEM((b_pad, hdim), jnp.float32),        # c state
        ],
    )
    return pl.pallas_call(
        functools.partial(lstm_kernel, t_blk=t_blk),
        out_shape=jax.ShapeDtypeStruct((n, hdim), jnp.float32),
        grid_spec=grid_spec,
        compiler_params=pltpu.CompilerParams(dimension_semantics=("arbitrary",)),
    )(x2d, m2d, wih_bf16, b_eff, whh_t)


# ---------------------------------- full forward -------------------------------------
def batch_rnn_forward(x, lengths, gamma, beta, w_ih, w_hh, *, t_blk=T_BLK):
    """x: (B, T, D) padded batch-first, lengths: (B,) int32 (descending).
    Returns (B, T, H) with zeros at padded positions."""
    b, t, d = x.shape
    hdim = w_hh.shape[1]

    b_pad = _round_up(b, SUBLANE)       # full-sublane batch tiles
    t_blk = max(1, min(t_blk, t))       # don't waste recurrent steps on short sequences
    t_pad = _round_up(t, t_blk)

    x_p = jnp.pad(x, ((0, b_pad - b), (0, t_pad - t), (0, 0)))
    len_p = jnp.pad(lengths, (0, b_pad - b))

    mask_bt = (jnp.arange(t_pad, dtype=jnp.int32)[None, :]
               < len_p[:, None]).astype(jnp.float32)                  # (B_pad, T_pad)

    x_tm = jnp.transpose(x_p, (1, 0, 2))                              # (T_pad, B_pad, D)
    m_tm = jnp.transpose(mask_bt, (1, 0))[:, :, None]                 # (T_pad, B_pad, 1)

    n = t_pad * b_pad
    x2d = x_tm.reshape(n, d)                                          # free reshape
    m2d = m_tm.reshape(n, 1)

    # --- pass 1: masked BatchNorm statistics over valid (packed) timesteps ---
    s, sq = bn_stats(x2d, m2d)
    cnt = jnp.maximum(jnp.sum(len_p).astype(jnp.float32), 1.0)        # guard cnt==0
    mean = s[0] / cnt
    var = jnp.maximum(sq[0] / cnt - mean * mean, 0.0)                 # biased variance
    scale = gamma * lax.rsqrt(var + EPS)                              # (D,)
    shift = beta - mean * scale                                       # (D,)

    # fold BN normalization + affine into the input projection
    w_eff = (w_ih.T * scale[:, None]).astype(jnp.bfloat16)            # (D, 4H)
    b_eff = (shift @ w_ih.T)[None, :].astype(jnp.float32)             # (1, 4H)

    # --- pass 2: fused projection + recurrence (gates stay on-chip) ---
    out2d = lstm_fused(x2d, m2d, w_eff, b_eff,
                       jnp.asarray(w_hh.T, jnp.float32), b_pad, t_blk)  # (N, H)

    out_tm = out2d.reshape(t_pad, b_pad, hdim)                          # free reshape
    return jnp.transpose(out_tm, (1, 0, 2))[:b, :t, :]                  # (B, T, H)


# ------------------------------- pure-JAX reference ----------------------------------
def ref_forward(x, lengths, gamma, beta, w_ih, w_hh):
    B, T, D = x.shape
    H = w_hh.shape[1]
    mask = (jnp.arange(T)[None, :] < lengths[:, None]).astype(x.dtype)
    m3 = mask[:, :, None]
    cnt = jnp.sum(mask)
    mean = jnp.sum(x * m3, axis=(0, 1)) / cnt
    var = jnp.sum(((x - mean) ** 2) * m3, axis=(0, 1)) / cnt
    xb = ((x - mean) / jnp.sqrt(var + EPS) * gamma + beta) * m3

    def step(carry, inp):
        h, c = carry
        xt, mt = inp
        g = xt @ w_ih.T + h @ w_hh.T
        i_ = jax.nn.sigmoid(g[:, :H])
        f_ = jax.nn.sigmoid(g[:, H:2 * H])
        g_ = jnp.tanh(g[:, 2 * H:3 * H])
        o_ = jax.nn.sigmoid(g[:, 3 * H:])
        c_new = f_ * c + i_ * g_
        h_new = o_ * jnp.tanh(c_new)
        h = mt * h_new + (1 - mt) * h
        c = mt * c_new + (1 - mt) * c
        return (h, c), mt * h_new

    xs = (jnp.transpose(xb, (1, 0, 2)), jnp.transpose(mask, (1, 0))[:, :, None])
    _, ys = lax.scan(step, (jnp.zeros((B, H)), jnp.zeros((B, H))), xs)
    return jnp.transpose(ys, (1, 0, 2))


if __name__ == "__main__":
    B, T, D, H = 2, 8, 16, 32   # batch, seq, input_size, hidden_size

    key = jax.random.PRNGKey(0)
    k_x, k_ih, k_hh, k_g, k_b = jax.random.split(key, 5)

    x = jax.random.normal(k_x, (B, T, D), dtype=jnp.float32)
    lengths = jnp.array([8, 5], dtype=jnp.int32)        # descending, as pack_padded requires

    gamma = 1.0 + 0.1 * jax.random.normal(k_g, (D,), jnp.float32)
    beta = 0.1 * jax.random.normal(k_b, (D,), jnp.float32)
    bound = 1.0 / np.sqrt(H)
    w_ih = jax.random.uniform(k_ih, (4 * H, D), jnp.float32, -bound, bound)  # weight_ih_l0
    w_hh = jax.random.uniform(k_hh, (4 * H, H), jnp.float32, -bound, bound)  # weight_hh_l0

    out = jax.jit(batch_rnn_forward)(x, lengths, gamma, beta, w_ih, w_hh)
    out = jax.block_until_ready(out)

    ref = ref_forward(x, lengths, gamma, beta, w_ih, w_hh)
    assert out.shape == (B, T, H)
    max_err = float(jnp.max(jnp.abs(out - ref)))
    # bf16 is used for the (folded-BN) input-projection matmul -> loosened tolerance
    assert np.allclose(np.asarray(out), np.asarray(ref), atol=5e-2, rtol=5e-2), \
        f"Pallas output mismatch vs reference (max abs err {max_err})"
    print("KERNEL_OK")
</pallas_src>

<mosaic_0001>
module attributes {stable_mosaic.version = 11 : i64} {
  func.func @bn_stats_kernel(%arg0: i32, %arg1: memref<64x16xf32, #tpu.memory_space<vmem>>, %arg2: memref<64x1xf32, #tpu.memory_space<vmem>>, %arg3: memref<1x16xf32, #tpu.memory_space<vmem>>, %arg4: memref<1x16xf32, #tpu.memory_space<vmem>>) attributes {dimension_semantics = [#tpu.dimension_semantics<arbitrary>], iteration_bounds = array<i64: 1>, scalar_prefetch = 0 : i64, scratch_operands = 0 : i64, tpu.core_type = #tpu.core_type<tc>, window_params = [{transform_indices = @transform_0, window_bounds = array<i64: 64, 16>}, {transform_indices = @transform_1, window_bounds = array<i64: 64, 1>}, {pipeline_mode = #tpu.pipeline_mode<synchronous>, transform_indices = @transform_2, window_bounds = array<i64: 1, 16>}, {pipeline_mode = #tpu.pipeline_mode<synchronous>, transform_indices = @transform_3, window_bounds = array<i64: 1, 16>}]} {
    %c0_i32 = arith.constant 0 : i32
    %0 = arith.cmpi eq, %arg0, %c0_i32 : i32
    %1 = arith.extui %0 : i1 to i32
    %c0_i32_0 = arith.constant 0 : i32
    %2 = arith.cmpi ne, %1, %c0_i32_0 : i32
    scf.if %2 {
      %cst_13 = arith.constant 0.000000e+00 : f32
      %18 = vector.broadcast %cst_13 : f32 to vector<1x16xf32>
      %c0_14 = arith.constant 0 : index
      %c0_15 = arith.constant 0 : index
      %19 = vector.load %arg3[%c0_14, %c0_15] : memref<1x16xf32, #tpu.memory_space<vmem>>, vector<1x16xf32>
      tpu.vector_store %arg3[%c0_14, %c0_15], %18 {strides = array<i32>} : memref<1x16xf32, #tpu.memory_space<vmem>>, vector<1x16xf32>,
      %cst_16 = arith.constant 0.000000e+00 : f32
      %20 = vector.broadcast %cst_16 : f32 to vector<1x16xf32>
      %c0_17 = arith.constant 0 : index
      %c0_18 = arith.constant 0 : index
      %21 = vector.load %arg4[%c0_17, %c0_18] : memref<1x16xf32, #tpu.memory_space<vmem>>, vector<1x16xf32>
      tpu.vector_store %arg4[%c0_17, %c0_18], %20 {strides = array<i32>} : memref<1x16xf32, #tpu.memory_space<vmem>>, vector<1x16xf32>,
    } else {
    }
    %c0 = arith.constant 0 : index
    %c0_1 = arith.constant 0 : index
    %3 = vector.load %arg1[%c0, %c0_1] : memref<64x16xf32, #tpu.memory_space<vmem>>, vector<64x16xf32>
    %c0_2 = arith.constant 0 : index
    %c0_3 = arith.constant 0 : index
    %4 = vector.load %arg2[%c0_2, %c0_3] : memref<64x1xf32, #tpu.memory_space<vmem>>, vector<64x1xf32>
    %5 = vector.broadcast %4 : vector<64x1xf32> to vector<64x16xf32>
    %6 = arith.mulf %3, %5 : vector<64x16xf32>
    %c0_4 = arith.constant 0 : index
    %c0_5 = arith.constant 0 : index
    %7 = vector.load %arg3[%c0_4, %c0_5] : memref<1x16xf32, #tpu.memory_space<vmem>>, vector<1x16xf32>
    %cst = arith.constant dense<0.000000e+00> : vector<16xf32>
    %8 = vector.multi_reduction <add>, %6, %cst [0] : vector<64x16xf32> to vector<16xf32>
    %9 = vector.shape_cast %8 : vector<16xf32> to vector<1x16xf32>
    %10 = arith.addf %7, %9 : vector<1x16xf32>
    %c0_6 = arith.constant 0 : index
    %c0_7 = arith.constant 0 : index
    %11 = vector.load %arg3[%c0_6, %c0_7] : memref<1x16xf32, #tpu.memory_space<vmem>>, vector<1x16xf32>
    tpu.vector_store %arg3[%c0_6, %c0_7], %10 {strides = array<i32>} : memref<1x16xf32, #tpu.memory_space<vmem>>, vector<1x16xf32>,
    %c0_8 = arith.constant 0 : index
    %c0_9 = arith.constant 0 : index
    %12 = vector.load %arg4[%c0_8, %c0_9] : memref<1x16xf32, #tpu.memory_space<vmem>>, vector<1x16xf32>
    %13 = arith.mulf %6, %3 : vector<64x16xf32>
    %cst_10 = arith.constant dense<0.000000e+00> : vector<16xf32>
    %14 = vector.multi_reduction <add>, %13, %cst_10 [0] : vector<64x16xf32> to vector<16xf32>
    %15 = vector.shape_cast %14 : vector<16xf32> to vector<1x16xf32>
    %16 = arith.addf %12, %15 : vector<1x16xf32>
    %c0_11 = arith.constant 0 : index
    %c0_12 = arith.constant 0 : index
    %17 = vector.load %arg4[%c0_11, %c0_12] : memref<1x16xf32, #tpu.memory_space<vmem>>, vector<1x16xf32>
    tpu.vector_store %arg4[%c0_11, %c0_12], %16 {strides = array<i32>} : memref<1x16xf32, #tpu.memory_space<vmem>>, vector<1x16xf32>,
    return
  }
  func.func @transform_0(%arg0: i32) -> (i32, i32) {
    %c0_i32 = arith.constant 0 : i32
    %c0_i32_0 = arith.constant 0 : i32
    return %arg0, %c0_i32 : i32, i32
  }
  func.func @transform_1(%arg0: i32) -> (i32, i32) {
    %c0_i32 = arith.constant 0 : i32
    %c0_i32_0 = arith.constant 0 : i32
    return %arg0, %c0_i32 : i32, i32
  }
  func.func @transform_2(%arg0: i32) -> (i32, i32) {
    %c0_i32 = arith.constant 0 : i32
    %c0_i32_0 = arith.constant 0 : i32
    %c0_i32_1 = arith.constant 0 : i32
    return %c0_i32, %c0_i32_0 : i32, i32
  }
  func.func @transform_3(%arg0: i32) -> (i32, i32) {
    %c0_i32 = arith.constant 0 : i32
    %c0_i32_0 = arith.constant 0 : i32
    %c0_i32_1 = arith.constant 0 : i32
    return %c0_i32, %c0_i32_0 : i32, i32
  }
}

module attributes {stable_mosaic.version = 11 : i64} {
  func.func @lstm_kernel(%arg0: i32, %arg1: memref<64x16xf32, #tpu.memory_space<vmem>>, %arg2: memref<64x1xf32, #tpu.memory_space<vmem>>, %arg3: memref<16x128xbf16, #tpu.memory_space<vmem>>, %arg4: memref<1x128xf32, #tpu.memory_space<vmem>>, %arg5: memref<32x128xf32, #tpu.memory_space<vmem>>, %arg6: memref<64x32xf32, #tpu.memory_space<vmem>>, %arg7: memref<64x128xf32, #tpu.memory_space<vmem>>, %arg8: memref<8x32xf32, #tpu.memory_space<vmem>>, %arg9: memref<8x32xf32, #tpu.memory_space<vmem>>) attributes {dimension_semantics = [#tpu.dimension_semantics<arbitrary>], iteration_bounds = array<i64: 1>, scalar_prefetch = 0 : i64, scratch_operands = 3 : i64, tpu.core_type = #tpu.core_type<tc>, window_params = [{transform_indices = @transform_0, window_bounds = array<i64: 64, 16>}, {transform_indices = @transform_1, window_bounds = array<i64: 64, 1>}, {pipeline_mode = #tpu.pipeline_mode<synchronous>, transform_indices = @transform_2, window_bounds = array<i64: 16, 128>}, {pipeline_mode = #tpu.pipeline_mode<synchronous>, transform_indices = @transform_3, window_bounds = array<i64: 1, 128>}, {pipeline_mode = #tpu.pipeline_mode<synchronous>, transform_indices = @transform_4, window_bounds = array<i64: 32, 128>}, {transform_indices = @transform_5, window_bounds = array<i64: 64, 32>}]} {
    %c0_i32 = arith.constant 0 : i32
    %0 = arith.cmpi eq, %arg0, %c0_i32 : i32
    %1 = arith.extui %0 : i1 to i32
    %c0_i32_0 = arith.constant 0 : i32
    %2 = arith.cmpi ne, %1, %c0_i32_0 : i32
    scf.if %2 {
      %cst_107 = arith.constant 0.000000e+00 : f32
      %352 = vector.broadcast %cst_107 : f32 to vector<8x32xf32>
      %c0_108 = arith.constant 0 : index
      %c0_109 = arith.constant 0 : index
      %353 = vector.load %arg8[%c0_108, %c0_109] : memref<8x32xf32, #tpu.memory_space<vmem>>, vector<8x32xf32>
      tpu.vector_store %arg8[%c0_108, %c0_109], %352 {strides = array<i32>} : memref<8x32xf32, #tpu.memory_space<vmem>>, vector<8x32xf32>,
      %cst_110 = arith.constant 0.000000e+00 : f32
      %354 = vector.broadcast %cst_110 : f32 to vector<8x32xf32>
      %c0_111 = arith.constant 0 : index
      %c0_112 = arith.constant 0 : index
      %355 = vector.load %arg9[%c0_111, %c0_112] : memref<8x32xf32, #tpu.memory_space<vmem>>, vector<8x32xf32>
      tpu.vector_store %arg9[%c0_111, %c0_112], %354 {strides = array<i32>} : memref<8x32xf32, #tpu.memory_space<vmem>>, vector<8x32xf32>,
    } else {
    }
    %c0 = arith.constant 0 : index
    %c0_1 = arith.constant 0 : index
    %3 = vector.load %arg1[%c0, %c0_1] : memref<64x16xf32, #tpu.memory_space<vmem>>, vector<64x16xf32>
    %4 = arith.truncf %3 : vector<64x16xf32> to vector<64x16xbf16>
    %c0_2 = arith.constant 0 : index
    %c0_3 = arith.constant 0 : index
    %5 = vector.load %arg3[%c0_2, %c0_3] : memref<16x128xbf16, #tpu.memory_space<vmem>>, vector<16x128xbf16>
    %cst = arith.constant dense<0.000000e+00> : vector<64x128xf32>
    %6 = tpu.matmul %4, %5, %cst {dimension_numbers = #tpu.dot_dimension_numbers<[1], [0], [0], [1], [0, 0, 1, 1], [], []>} : vector<64x16xbf16>, vector<16x128xbf16>, vector<64x128xf32> -> vector<64x128xf32>
    %c0_4 = arith.constant 0 : index
    %c0_5 = arith.constant 0 : index
    %7 = vector.load %arg4[%c0_4, %c0_5] : memref<1x128xf32, #tpu.memory_space<vmem>>, vector<1x128xf32>
    %8 = vector.broadcast %7 : vector<1x128xf32> to vector<64x128xf32>
    %9 = arith.addf %6, %8 : vector<64x128xf32>
    %c0_6 = arith.constant 0 : index
    %c0_7 = arith.constant 0 : index
    %10 = vector.load %arg7[%c0_6, %c0_7] : memref<64x128xf32, #tpu.memory_space<vmem>>, vector<64x128xf32>
    tpu.vector_store %arg7[%c0_6, %c0_7], %9 {strides = array<i32>} : memref<64x128xf32, #tpu.memory_space<vmem>>, vector<64x128xf32>,
    %c0_8 = arith.constant 0 : index
    %c0_9 = arith.constant 0 : index
    %11 = vector.load %arg5[%c0_8, %c0_9] : memref<32x128xf32, #tpu.memory_space<vmem>>, vector<32x128xf32>
    %c0_10 = arith.constant 0 : index
    %c0_11 = arith.constant 0 : index
    %12 = vector.load %arg8[%c0_10, %c0_11] : memref<8x32xf32, #tpu.memory_space<vmem>>, vector<8x32xf32>
    %c0_12 = arith.constant 0 : index
    %c0_13 = arith.constant 0 : index
    %13 = vector.load %arg9[%c0_12, %c0_13] : memref<8x32xf32, #tpu.memory_space<vmem>>, vector<8x32xf32>
    %c0_14 = arith.constant 0 : index
    %c0_15 = arith.constant 0 : index
    %14 = vector.load %arg7[%c0_14, %c0_15] : memref<64x128xf32, #tpu.memory_space<vmem>>, vector<8x128xf32>
    %cst_16 = arith.constant dense<0.000000e+00> : vector<8x128xf32>
    %15 = tpu.matmul %12, %11, %cst_16 {dimension_numbers = #tpu.dot_dimension_numbers<[1], [0], [0], [1], [0, 0, 1, 1], [], []>} : vector<8x32xf32>, vector<32x128xf32>, vector<8x128xf32> -> vector<8x128xf32>
    %16 = arith.addf %14, %15 : vector<8x128xf32>
    %17 = vector.extract_strided_slice %16 {offsets = [0, 0], sizes = [8, 32], strides = [1, 1]} : vector<8x128xf32> to vector<8x32xf32>
    %18 = arith.negf %17 : vector<8x32xf32>
    %19 = math.exp %18 : vector<8x32xf32>
    %cst_17 = arith.constant 1.000000e+00 : f32
    %20 = vector.broadcast %cst_17 : f32 to vector<8x32xf32>
    %21 = arith.addf %20, %19 : vector<8x32xf32>
    %22 = arith.divf %20, %21 : vector<8x32xf32>
    %23 = vector.extract_strided_slice %16 {offsets = [0, 32], sizes = [8, 32], strides = [1, 1]} : vector<8x128xf32> to vector<8x32xf32>
    %24 = arith.negf %23 : vector<8x32xf32>
    %25 = math.exp %24 : vector<8x32xf32>
    %cst_18 = arith.constant 1.000000e+00 : f32
    %26 = vector.broadcast %cst_18 : f32 to vector<8x32xf32>
    %27 = arith.addf %26, %25 : vector<8x32xf32>
    %28 = arith.divf %26, %27 : vector<8x32xf32>
    %29 = vector.extract_strided_slice %16 {offsets = [0, 64], sizes = [8, 32], strides = [1, 1]} : vector<8x128xf32> to vector<8x32xf32>
    %30 = math.tanh %29 : vector<8x32xf32>
    %31 = vector.extract_strided_slice %16 {offsets = [0, 96], sizes = [8, 32], strides = [1, 1]} : vector<8x128xf32> to vector<8x32xf32>
    %32 = arith.negf %31 : vector<8x32xf32>
    %33 = math.exp %32 : vector<8x32xf32>
    %cst_19 = arith.constant 1.000000e+00 : f32
    %34 = vector.broadcast %cst_19 : f32 to vector<8x32xf32>
    %35 = arith.addf %34, %33 : vector<8x32xf32>
    %36 = arith.divf %34, %35 : vector<8x32xf32>
    %37 = arith.mulf %28, %13 : vector<8x32xf32>
    %38 = arith.mulf %22, %30 : vector<8x32xf32>
    %39 = arith.addf %37, %38 : vector<8x32xf32>
    %40 = math.tanh %39 : vector<8x32xf32>
    %41 = arith.mulf %36, %40 : vector<8x32xf32>
    %c0_20 = arith.constant 0 : index
    %c0_21 = arith.constant 0 : index
    %42 = vector.load %arg2[%c0_20, %c0_21] : memref<64x1xf32, #tpu.memory_space<vmem>>, vector<8x1xf32>
    %cst_22 = arith.constant 0.000000e+00 : f32
    %43 = vector.broadcast %cst_22 : f32 to vector<8x1xf32>
    %44 = arith.cmpf ogt, %42, %43 : vector<8x1xf32>
    %45 = vector.shape_cast %44 : vector<8x1xi1> to vector<8x1xi1>
    %46 = vector.broadcast %45 : vector<8x1xi1> to vector<8x32xi1>
    %47 = arith.select %46, %41, %12 : vector<8x32xi1>, vector<8x32xf32>
    %48 = vector.shape_cast %44 : vector<8x1xi1> to vector<8x1xi1>
    %49 = vector.broadcast %48 : vector<8x1xi1> to vector<8x32xi1>
    %50 = arith.select %49, %39, %13 : vector<8x32xi1>, vector<8x32xf32>
    %cst_23 = arith.constant 0.000000e+00 : f32
    %51 = vector.shape_cast %44 : vector<8x1xi1> to vector<8x1xi1>
    %52 = vector.broadcast %51 : vector<8x1xi1> to vector<8x32xi1>
    %53 = vector.broadcast %cst_23 : f32 to vector<8x32xf32>
    %54 = arith.select %52, %41, %53 : vector<8x32xi1>, vector<8x32xf32>
    %c0_24 = arith.constant 0 : index
    %c0_25 = arith.constant 0 : index
    %55 = vector.load %arg6[%c0_24, %c0_25] : memref<64x32xf32, #tpu.memory_space<vmem>>, vector<8x32xf32>
    tpu.vector_store %arg6[%c0_24, %c0_25], %54 {strides = array<i32>} : memref<64x32xf32, #tpu.memory_space<vmem>>, vector<8x32xf32>,
    %c8 = arith.constant 8 : index
    %c0_26 = arith.constant 0 : index
    %56 = vector.load %arg7[%c8, %c0_26] : memref<64x128xf32, #tpu.memory_space<vmem>>, vector<8x128xf32>
    %cst_27 = arith.constant dense<0.000000e+00> : vector<8x128xf32>
    %57 = tpu.matmul %47, %11, %cst_27 {dimension_numbers = #tpu.dot_dimension_numbers<[1], [0], [0], [1], [0, 0, 1, 1], [], []>} : vector<8x32xf32>, vector<32x128xf32>, vector<8x128xf32> -> vector<8x128xf32>
    %58 = arith.addf %56, %57 : vector<8x128xf32>
    %59 = vector.extract_strided_slice %58 {offsets = [0, 0], sizes = [8, 32], strides = [1, 1]} : vector<8x128xf32> to vector<8x32xf32>
    %60 = arith.negf %59 : vector<8x32xf32>
    %61 = math.exp %60 : vector<8x32xf32>
    %cst_28 = arith.constant 1.000000e+00 : f32
    %62 = vector.broadcast %cst_28 : f32 to vector<8x32xf32>
    %63 = arith.addf %62, %61 : vector<8x32xf32>
    %64 = arith.divf %62, %63 : vector<8x32xf32>
    %65 = vector.extract_strided_slice %58 {offsets = [0, 32], sizes = [8, 32], strides = [1, 1]} : vector<8x128xf32> to vector<8x32xf32>
    %66 = arith.negf %65 : vector<8x32xf32>
    %67 = math.exp %66 : vector<8x32xf32>
    %cst_29 = arith.constant 1.000000e+00 : f32
    %68 = vector.broadcast %cst_29 : f32 to vector<8x32xf32>
    %69 = arith.addf %68, %67 : vector<8x32xf32>
    %70 = arith.divf %68, %69 : vector<8x32xf32>
    %71 = vector.extract_strided_slice %58 {offsets = [0, 64], sizes = [8, 32], strides = [1, 1]} : vector<8x128xf32> to vector<8x32xf32>
    %72 = math.tanh %71 : vector<8x32xf32>
    %73 = vector.extract_strided_slice %58 {offsets = [0, 96], sizes = [8, 32], strides = [1, 1]} : vector<8x128xf32> to vector<8x32xf32>
    %74 = arith.negf %73 : vector<8x32xf32>
    %75 = math.exp %74 : vector<8x32xf32>
    %cst_30 = arith.constant 1.000000e+00 : f32
    %76 = vector.broadcast %cst_30 : f32 to vector<8x32xf32>
    %77 = arith.addf %76, %75 : vector<8x32xf32>
    %78 = arith.divf %76, %77 : vector<8x32xf32>
    %79 = arith.mulf %70, %50 : vector<8x32xf32>
    %80 = arith.mulf %64, %72 : vector<8x32xf32>
    %81 = arith.addf %79, %80 : vector<8x32xf32>
    %82 = math.tanh %81 : vector<8x32xf32>
    %83 = arith.mulf %78, %82 : vector<8x32xf32>
    %c8_31 = arith.constant 8 : index
    %c0_32 = arith.constant 0 : index
    %84 = vector.load %arg2[%c8_31, %c0_32] : memref<64x1xf32, #tpu.memory_space<vmem>>, vector<8x1xf32>
    %cst_33 = arith.constant 0.000000e+00 : f32
    %85 = vector.broadcast %cst_33 : f32 to vector<8x1xf32>
    %86 = arith.cmpf ogt, %84, %85 : vector<8x1xf32>
    %87 = vector.shape_cast %86 : vector<8x1xi1> to vector<8x1xi1>
    %88 = vector.broadcast %87 : vector<8x1xi1> to vector<8x32xi1>
    %89 = arith.select %88, %83, %47 : vector<8x32xi1>, vector<8x32xf32>
    %90 = vector.shape_cast %86 : vector<8x1xi1> to vector<8x1xi1>
    %91 = vector.broadcast %90 : vector<8x1xi1> to vector<8x32xi1>
    %92 = arith.select %91, %81, %50 : vector<8x32xi1>, vector<8x32xf32>
    %cst_34 = arith.constant 0.000000e+00 : f32
    %93 = vector.shape_cast %86 : vector<8x1xi1> to vector<8x1xi1>
    %94 = vector.broadcast %93 : vector<8x1xi1> to vector<8x32xi1>
    %95 = vector.broadcast %cst_34 : f32 to vector<8x32xf32>
    %96 = arith.select %94, %83, %95 : vector<8x32xi1>, vector<8x32xf32>
    %c8_35 = arith.constant 8 : index
    %c0_36 = arith.constant 0 : index
    %97 = vector.load %arg6[%c8_35, %c0_36] : memref<64x32xf32, #tpu.memory_space<vmem>>, vector<8x32xf32>
    tpu.vector_store %arg6[%c8_35, %c0_36], %96 {strides = array<i32>} : memref<64x32xf32, #tpu.memory_space<vmem>>, vector<8x32xf32>,
    %c16 = arith.constant 16 : index
    %c0_37 = arith.constant 0 : index
    %98 = vector.load %arg7[%c16, %c0_37] : memref<64x128xf32, #tpu.memory_space<vmem>>, vector<8x128xf32>
    %cst_38 = arith.constant dense<0.000000e+00> : vector<8x128xf32>
    %99 = tpu.matmul %89, %11, %cst_38 {dimension_numbers = #tpu.dot_dimension_numbers<[1], [0], [0], [1], [0, 0, 1, 1], [], []>} : vector<8x32xf32>, vector<32x128xf32>, vector<8x128xf32> -> vector<8x128xf32>
    %100 = arith.addf %98, %99 : vector<8x128xf32>
    %101 = vector.extract_strided_slice %100 {offsets = [0, 0], sizes = [8, 32], strides = [1, 1]} : vector<8x128xf32> to vector<8x32xf32>
    %102 = arith.negf %101 : vector<8x32xf32>
    %103 = math.exp %102 : vector<8x32xf32>
    %cst_39 = arith.constant 1.000000e+00 : f32
    %104 = vector.broadcast %cst_39 : f32 to vector<8x32xf32>
    %105 = arith.addf %104, %103 : vector<8x32xf32>
    %106 = arith.divf %104, %105 : vector<8x32xf32>
    %107 = vector.extract_strided_slice %100 {offsets = [0, 32], sizes = [8, 32], strides = [1, 1]} : vector<8x128xf32> to vector<8x32xf32>
    %108 = arith.negf %107 : vector<8x32xf32>
    %109 = math.exp %108 : vector<8x32xf32>
    %cst_40 = arith.constant 1.000000e+00 : f32
    %110 = vector.broadcast %cst_40 : f32 to vector<8x32xf32>
    %111 = arith.addf %110, %109 : vector<8x32xf32>
    %112 = arith.divf %110, %111 : vector<8x32xf32>
    %113 = vector.extract_strided_slice %100 {offsets = [0, 64], sizes = [8, 32], strides = [1, 1]} : vector<8x128xf32> to vector<8x32xf32>
    %114 = math.tanh %113 : vector<8x32xf32>
    %115 = vector.extract_strided_slice %100 {offsets = [0, 96], sizes = [8, 32], strides = [1, 1]} : vector<8x128xf32> to vector<8x32xf32>
    %116 = arith.negf %115 : vector<8x32xf32>
    %117 = math.exp %116 : vector<8x32xf32>
    %cst_41 = arith.constant 1.000000e+00 : f32
    %118 = vector.broadcast %cst_41 : f32 to vector<8x32xf32>
    %119 = arith.addf %118, %117 : vector<8x32xf32>
    %120 = arith.divf %118, %119 : vector<8x32xf32>
    %121 = arith.mulf %112, %92 : vector<8x32xf32>
    %122 = arith.mulf %106, %114 : vector<8x32xf32>
    %123 = arith.addf %121, %122 : vector<8x32xf32>
    %124 = math.tanh %123 : vector<8x32xf32>
    %125 = arith.mulf %120, %124 : vector<8x32xf32>
    %c16_42 = arith.constant 16 : index
    %c0_43 = arith.constant 0 : index
    %126 = vector.load %arg2[%c16_42, %c0_43] : memref<64x1xf32, #tpu.memory_space<vmem>>, vector<8x1xf32>
    %cst_44 = arith.constant 0.000000e+00 : f32
    %127 = vector.broadcast %cst_44 : f32 to vector<8x1xf32>
    %128 = arith.cmpf ogt, %126, %127 : vector<8x1xf32>
    %129 = vector.shape_cast %128 : vector<8x1xi1> to vector<8x1xi1>
    %130 = vector.broadcast %129 : vector<8x1xi1> to vector<8x32xi1>
    %131 = arith.select %130, %125, %89 : vector<8x32xi1>, vector<8x32xf32>
    %132 = vector.shape_cast %128 : vector<8x1xi1> to vector<8x1xi1>
    %133 = vector.broadcast %132 : vector<8x1xi1> to vector<8x32xi1>
    %134 = arith.select %133, %123, %92 : vector<8x32xi1>, vector<8x32xf32>
    %cst_45 = arith.constant 0.000000e+00 : f32
    %135 = vector.shape_cast %128 : vector<8x1xi1> to vector<8x1xi1>
    %136 = vector.broadcast %135 : vector<8x1xi1> to vector<8x32xi1>
    %137 = vector.broadcast %cst_45 : f32 to vector<8x32xf32>
    %138 = arith.select %136, %125, %137 : vector<8x32xi1>, vector<8x32xf32>
    %c16_46 = arith.constant 16 : index
    %c0_47 = arith.constant 0 : index
    %139 = vector.load %arg6[%c16_46, %c0_47] : memref<64x32xf32, #tpu.memory_space<vmem>>, vector<8x32xf32>
    tpu.vector_store %arg6[%c16_46, %c0_47], %138 {strides = array<i32>} : memref<64x32xf32, #tpu.memory_space<vmem>>, vector<8x32xf32>,
    %c24 = arith.constant 24 : index
    %c0_48 = arith.constant 0 : index
    %140 = vector.load %arg7[%c24, %c0_48] : memref<64x128xf32, #tpu.memory_space<vmem>>, vector<8x128xf32>
    %cst_49 = arith.constant dense<0.000000e+00> : vector<8x128xf32>
    %141 = tpu.matmul %131, %11, %cst_49 {dimension_numbers = #tpu.dot_dimension_numbers<[1], [0], [0], [1], [0, 0, 1, 1], [], []>} : vector<8x32xf32>, vector<32x128xf32>, vector<8x128xf32> -> vector<8x128xf32>
    %142 = arith.addf %140, %141 : vector<8x128xf32>
    %143 = vector.extract_strided_slice %142 {offsets = [0, 0], sizes = [8, 32], strides = [1, 1]} : vector<8x128xf32> to vector<8x32xf32>
    %144 = arith.negf %143 : vector<8x32xf32>
    %145 = math.exp %144 : vector<8x32xf32>
    %cst_50 = arith.constant 1.000000e+00 : f32
    %146 = vector.broadcast %cst_50 : f32 to vector<8x32xf32>
    %147 = arith.addf %146, %145 : vector<8x32xf32>
    %148 = arith.divf %146, %147 : vector<8x32xf32>
    %149 = vector.extract_strided_slice %142 {offsets = [0, 32], sizes = [8, 32], strides = [1, 1]} : vector<8x128xf32> to vector<8x32xf32>
    %150 = arith.negf %149 : vector<8x32xf32>
    %151 = math.exp %150 : vector<8x32xf32>
    %cst_51 = arith.constant 1.000000e+00 : f32
    %152 = vector.broadcast %cst_51 : f32 to vector<8x32xf32>
    %153 = arith.addf %152, %151 : vector<8x32xf32>
    %154 = arith.divf %152, %153 : vector<8x32xf32>
    %155 = vector.extract_strided_slice %142 {offsets = [0, 64], sizes = [8, 32], strides = [1, 1]} : vector<8x128xf32> to vector<8x32xf32>
    %156 = math.tanh %155 : vector<8x32xf32>
    %157 = vector.extract_strided_slice %142 {offsets = [0, 96], sizes = [8, 32], strides = [1, 1]} : vector<8x128xf32> to vector<8x32xf32>
    %158 = arith.negf %157 : vector<8x32xf32>
    %159 = math.exp %158 : vector<8x32xf32>
    %cst_52 = arith.constant 1.000000e+00 : f32
    %160 = vector.broadcast %cst_52 : f32 to vector<8x32xf32>
    %161 = arith.addf %160, %159 : vector<8x32xf32>
    %162 = arith.divf %160, %161 : vector<8x32xf32>
    %163 = arith.mulf %154, %134 : vector<8x32xf32>
    %164 = arith.mulf %148, %156 : vector<8x32xf32>
    %165 = arith.addf %163, %164 : vector<8x32xf32>
    %166 = math.tanh %165 : vector<8x32xf32>
    %167 = arith.mulf %162, %166 : vector<8x32xf32>
    %c24_53 = arith.constant 24 : index
    %c0_54 = arith.constant 0 : index
    %168 = vector.load %arg2[%c24_53, %c0_54] : memref<64x1xf32, #tpu.memory_space<vmem>>, vector<8x1xf32>
    %cst_55 = arith.constant 0.000000e+00 : f32
    %169 = vector.broadcast %cst_55 : f32 to vector<8x1xf32>
    %170 = arith.cmpf ogt, %168, %169 : vector<8x1xf32>
    %171 = vector.shape_cast %170 : vector<8x1xi1> to vector<8x1xi1>
    %172 = vector.broadcast %171 : vector<8x1xi1> to vector<8x32xi1>
    %173 = arith.select %172, %167, %131 : vector<8x32xi1>, vector<8x32xf32>
    %174 = vector.shape_cast %170 : vector<8x1xi1> to vector<8x1xi1>
    %175 = vector.broadcast %174 : vector<8x1xi1> to vector<8x32xi1>
    %176 = arith.select %175, %165, %134 : vector<8x32xi1>, vector<8x32xf32>
    %cst_56 = arith.constant 0.000000e+00 : f32
    %177 = vector.shape_cast %170 : vector<8x1xi1> to vector<8x1xi1>
    %178 = vector.broadcast %177 : vector<8x1xi1> to vector<8x32xi1>
    %179 = vector.broadcast %cst_56 : f32 to vector<8x32xf32>
    %180 = arith.select %178, %167, %179 : vector<8x32xi1>, vector<8x32xf32>
    %c24_57 = arith.constant 24 : index
    %c0_58 = arith.constant 0 : index
    %181 = vector.load %arg6[%c24_57, %c0_58] : memref<64x32xf32, #tpu.memory_space<vmem>>, vector<8x32xf32>
    tpu.vector_store %arg6[%c24_57, %c0_58], %180 {strides = array<i32>} : memref<64x32xf32, #tpu.memory_space<vmem>>, vector<8x32xf32>,
    %c32 = arith.constant 32 : index
    %c0_59 = arith.constant 0 : index
    %182 = vector.load %arg7[%c32, %c0_59] : memref<64x128xf32, #tpu.memory_space<vmem>>, vector<8x128xf32>
    %cst_60 = arith.constant dense<0.000000e+00> : vector<8x128xf32>
    %183 = tpu.matmul %173, %11, %cst_60 {dimension_numbers = #tpu.dot_dimension_numbers<[1], [0], [0], [1], [0, 0, 1, 1], [], []>} : vector<8x32xf32>, vector<32x128xf32>, vector<8x128xf32> -> vector<8x128xf32>
    %184 = arith.addf %182, %183 : vector<8x128xf32>
    %185 = vector.extract_strided_slice %184 {offsets = [0, 0], sizes = [8, 32], strides = [1, 1]} : vector<8x128xf32> to vector<8x32xf32>
    %186 = arith.negf %185 : vector<8x32xf32>
    %187 = math.exp %186 : vector<8x32xf32>
    %cst_61 = arith.constant 1.000000e+00 : f32
    %188 = vector.broadcast %cst_61 : f32 to vector<8x32xf32>
    %189 = arith.addf %188, %187 : vector<8x32xf32>
    %190 = arith.divf %188, %189 : vector<8x32xf32>
    %191 = vector.extract_strided_slice %184 {offsets = [0, 32], sizes = [8, 32], strides = [1, 1]} : vector<8x128xf32> to vector<8x32xf32>
    %192 = arith.negf %191 : vector<8x32xf32>
    %193 = math.exp %192 : vector<8x32xf32>
    %cst_62 = arith.constant 1.000000e+00 : f32
    %194 = vector.broadcast %cst_62 : f32 to vector<8x32xf32>
    %195 = arith.addf %194, %193 : vector<8x32xf32>
    %196 = arith.divf %194, %195 : vector<8x32xf32>
    %197 = vector.extract_strided_slice %184 {offsets = [0, 64], sizes = [8, 32], strides = [1, 1]} : vector<8x128xf32> to vector<8x32xf32>
    %198 = math.tanh %197 : vector<8x32xf32>
    %199 = vector.extract_strided_slice %184 {offsets = [0, 96], sizes = [8, 32], strides = [1, 1]} : vector<8x128xf32> to vector<8x32xf32>
    %200 = arith.negf %199 : vector<8x32xf32>
    %201 = math.exp %200 : vector<8x32xf32>
    %cst_63 = arith.constant 1.000000e+00 : f32
    %202 = vector.broadcast %cst_63 : f32 to vector<8x32xf32>
    %203 = arith.addf %202, %201 : vector<8x32xf32>
    %204 = arith.divf %202, %203 : vector<8x32xf32>
    %205 = arith.mulf %196, %176 : vector<8x32xf32>
    %206 = arith.mulf %190, %198 : vector<8x32xf32>
    %207 = arith.addf %205, %206 : vector<8x32xf32>
    %208 = math.tanh %207 : vector<8x32xf32>
    %209 = arith.mulf %204, %208 : vector<8x32xf32>
    %c32_64 = arith.constant 32 : index
    %c0_65 = arith.constant 0 : index
    %210 = vector.load %arg2[%c32_64, %c0_65] : memref<64x1xf32, #tpu.memory_space<vmem>>, vector<8x1xf32>
    %cst_66 = arith.constant 0.000000e+00 : f32
    %211 = vector.broadcast %cst_66 : f32 to vector<8x1xf32>
    %212 = arith.cmpf ogt, %210, %211 : vector<8x1xf32>
    %213 = vector.shape_cast %212 : vector<8x1xi1> to vector<8x1xi1>
    %214 = vector.broadcast %213 : vector<8x1xi1> to vector<8x32xi1>
    %215 = arith.select %214, %209, %173 : vector<8x32xi1>, vector<8x32xf32>
    %216 = vector.shape_cast %212 : vector<8x1xi1> to vector<8x1xi1>
    %217 = vector.broadcast %216 : vector<8x1xi1> to vector<8x32xi1>
    %218 = arith.select %217, %207, %176 : vector<8x32xi1>, vector<8x32xf32>
    %cst_67 = arith.constant 0.000000e+00 : f32
    %219 = vector.shape_cast %212 : vector<8x1xi1> to vector<8x1xi1>
    %220 = vector.broadcast %219 : vector<8x1xi1> to vector<8x32xi1>
    %221 = vector.broadcast %cst_67 : f32 to vector<8x32xf32>
    %222 = arith.select %220, %209, %221 : vector<8x32xi1>, vector<8x32xf32>
    %c32_68 = arith.constant 32 : index
    %c0_69 = arith.constant 0 : index
    %223 = vector.load %arg6[%c32_68, %c0_69] : memref<64x32xf32, #tpu.memory_space<vmem>>, vector<8x32xf32>
    tpu.vector_store %arg6[%c32_68, %c0_69], %222 {strides = array<i32>} : memref<64x32xf32, #tpu.memory_space<vmem>>, vector<8x32xf32>,
    %c40 = arith.constant 40 : index
    %c0_70 = arith.constant 0 : index
    %224 = vector.load %arg7[%c40, %c0_70] : memref<64x128xf32, #tpu.memory_space<vmem>>, vector<8x128xf32>
    %cst_71 = arith.constant dense<0.000000e+00> : vector<8x128xf32>
    %225 = tpu.matmul %215, %11, %cst_71 {dimension_numbers = #tpu.dot_dimension_numbers<[1], [0], [0], [1], [0, 0, 1, 1], [], []>} : vector<8x32xf32>, vector<32x128xf32>, vector<8x128xf32> -> vector<8x128xf32>
    %226 = arith.addf %224, %225 : vector<8x128xf32>
    %227 = vector.extract_strided_slice %226 {offsets = [0, 0], sizes = [8, 32], strides = [1, 1]} : vector<8x128xf32> to vector<8x32xf32>
    %228 = arith.negf %227 : vector<8x32xf32>
    %229 = math.exp %228 : vector<8x32xf32>
    %cst_72 = arith.constant 1.000000e+00 : f32
    %230 = vector.broadcast %cst_72 : f32 to vector<8x32xf32>
    %231 = arith.addf %230, %229 : vector<8x32xf32>
    %232 = arith.divf %230, %231 : vector<8x32xf32>
    %233 = vector.extract_strided_slice %226 {offsets = [0, 32], sizes = [8, 32], strides = [1, 1]} : vector<8x128xf32> to vector<8x32xf32>
    %234 = arith.negf %233 : vector<8x32xf32>
    %235 = math.exp %234 : vector<8x32xf32>
    %cst_73 = arith.constant 1.000000e+00 : f32
    %236 = vector.broadcast %cst_73 : f32 to vector<8x32xf32>
    %237 = arith.addf %236, %235 : vector<8x32xf32>
    %238 = arith.divf %236, %237 : vector<8x32xf32>
    %239 = vector.extract_strided_slice %226 {offsets = [0, 64], sizes = [8, 32], strides = [1, 1]} : vector<8x128xf32> to vector<8x32xf32>
    %240 = math.tanh %239 : vector<8x32xf32>
    %241 = vector.extract_strided_slice %226 {offsets = [0, 96], sizes = [8, 32], strides = [1, 1]} : vector<8x128xf32> to vector<8x32xf32>
    %242 = arith.negf %241 : vector<8x32xf32>
    %243 = math.exp %242 : vector<8x32xf32>
    %cst_74 = arith.constant 1.000000e+00 : f32
    %244 = vector.broadcast %cst_74 : f32 to vector<8x32xf32>
    %245 = arith.addf %244, %243 : vector<8x32xf32>
    %246 = arith.divf %244, %245 : vector<8x32xf32>
    %247 = arith.mulf %238, %218 : vector<8x32xf32>
    %248 = arith.mulf %232, %240 : vector<8x32xf32>
    %249 = arith.addf %247, %248 : vector<8x32xf32>
    %250 = math.tanh %249 : vector<8x32xf32>
    %251 = arith.mulf %246, %250 : vector<8x32xf32>
    %c40_75 = arith.constant 40 : index
    %c0_76 = arith.constant 0 : index
    %252 = vector.load %arg2[%c40_75, %c0_76] : memref<64x1xf32, #tpu.memory_space<vmem>>, vector<8x1xf32>
    %cst_77 = arith.constant 0.000000e+00 : f32
    %253 = vector.broadcast %cst_77 : f32 to vector<8x1xf32>
    %254 = arith.cmpf ogt, %252, %253 : vector<8x1xf32>
    %255 = vector.shape_cast %254 : vector<8x1xi1> to vector<8x1xi1>
    %256 = vector.broadcast %255 : vector<8x1xi1> to vector<8x32xi1>
    %257 = arith.select %256, %251, %215 : vector<8x32xi1>, vector<8x32xf32>
    %258 = vector.shape_cast %254 : vector<8x1xi1> to vector<8x1xi1>
    %259 = vector.broadcast %258 : vector<8x1xi1> to vector<8x32xi1>
    %260 = arith.select %259, %249, %218 : vector<8x32xi1>, vector<8x32xf32>
    %cst_78 = arith.constant 0.000000e+00 : f32
    %261 = vector.shape_cast %254 : vector<8x1xi1> to vector<8x1xi1>
    %262 = vector.broadcast %261 : vector<8x1xi1> to vector<8x32xi1>
    %263 = vector.broadcast %cst_78 : f32 to vector<8x32xf32>
    %264 = arith.select %262, %251, %263 : vector<8x32xi1>, vector<8x32xf32>
    %c40_79 = arith.constant 40 : index
    %c0_80 = arith.constant 0 : index
    %265 = vector.load %arg6[%c40_79, %c0_80] : memref<64x32xf32, #tpu.memory_space<vmem>>, vector<8x32xf32>
    tpu.vector_store %arg6[%c40_79, %c0_80], %264 {strides = array<i32>} : memref<64x32xf32, #tpu.memory_space<vmem>>, vector<8x32xf32>,
    %c48 = arith.constant 48 : index
    %c0_81 = arith.constant 0 : index
    %266 = vector.load %arg7[%c48, %c0_81] : memref<64x128xf32, #tpu.memory_space<vmem>>, vector<8x128xf32>
    %cst_82 = arith.constant dense<0.000000e+00> : vector<8x128xf32>
    %267 = tpu.matmul %257, %11, %cst_82 {dimension_numbers = #tpu.dot_dimension_numbers<[1], [0], [0], [1], [0, 0, 1, 1], [], []>} : vector<8x32xf32>, vector<32x128xf32>, vector<8x128xf32> -> vector<8x128xf32>
    %268 = arith.addf %266, %267 : vector<8x128xf32>
    %269 = vector.extract_strided_slice %268 {offsets = [0, 0], sizes = [8, 32], strides = [1, 1]} : vector<8x128xf32> to vector<8x32xf32>
    %270 = arith.negf %269 : vector<8x32xf32>
    %271 = math.exp %270 : vector<8x32xf32>
    %cst_83 = arith.constant 1.000000e+00 : f32
    %272 = vector.broadcast %cst_83 : f32 to vector<8x32xf32>
    %273 = arith.addf %272, %271 : vector<8x32xf32>
    %274 = arith.divf %272, %273 : vector<8x32xf32>
    %275 = vector.extract_strided_slice %268 {offsets = [0, 32], sizes = [8, 32], strides = [1, 1]} : vector<8x128xf32> to vector<8x32xf32>
    %276 = arith.negf %275 : vector<8x32xf32>
    %277 = math.exp %276 : vector<8x32xf32>
    %cst_84 = arith.constant 1.000000e+00 : f32
    %278 = vector.broadcast %cst_84 : f32 to vector<8x32xf32>
    %279 = arith.addf %278, %277 : vector<8x32xf32>
    %280 = arith.divf %278, %279 : vector<8x32xf32>
    %281 = vector.extract_strided_slice %268 {offsets = [0, 64], sizes = [8, 32], strides = [1, 1]} : vector<8x128xf32> to vector<8x32xf32>
    %282 = math.tanh %281 : vector<8x32xf32>
    %283 = vector.extract_strided_slice %268 {offsets = [0, 96], sizes = [8, 32], strides = [1, 1]} : vector<8x128xf32> to vector<8x32xf32>
    %284 = arith.negf %283 : vector<8x32xf32>
    %285 = math.exp %284 : vector<8x32xf32>
    %cst_85 = arith.constant 1.000000e+00 : f32
    %286 = vector.broadcast %cst_85 : f32 to vector<8x32xf32>
    %287 = arith.addf %286, %285 : vector<8x32xf32>
    %288 = arith.divf %286, %287 : vector<8x32xf32>
    %289 = arith.mulf %280, %260 : vector<8x32xf32>
    %290 = arith.mulf %274, %282 : vector<8x32xf32>
    %291 = arith.addf %289, %290 : vector<8x32xf32>
    %292 = math.tanh %291 : vector<8x32xf32>
    %293 = arith.mulf %288, %292 : vector<8x32xf32>
    %c48_86 = arith.constant 48 : index
    %c0_87 = arith.constant 0 : index
    %294 = vector.load %arg2[%c48_86, %c0_87] : memref<64x1xf32, #tpu.memory_space<vmem>>, vector<8x1xf32>
    %cst_88 = arith.constant 0.000000e+00 : f32
    %295 = vector.broadcast %cst_88 : f32 to vector<8x1xf32>
    %296 = arith.cmpf ogt, %294, %295 : vector<8x1xf32>
    %297 = vector.shape_cast %296 : vector<8x1xi1> to vector<8x1xi1>
    %298 = vector.broadcast %297 : vector<8x1xi1> to vector<8x32xi1>
    %299 = arith.select %298, %293, %257 : vector<8x32xi1>, vector<8x32xf32>
    %300 = vector.shape_cast %296 : vector<8x1xi1> to vector<8x1xi1>
    %301 = vector.broadcast %300 : vector<8x1xi1> to vector<8x32xi1>
    %302 = arith.select %301, %291, %260 : vector<8x32xi1>, vector<8x32xf32>
    %cst_89 = arith.constant 0.000000e+00 : f32
    %303 = vector.shape_cast %296 : vector<8x1xi1> to vector<8x1xi1>
    %304 = vector.broadcast %303 : vector<8x1xi1> to vector<8x32xi1>
    %305 = vector.broadcast %cst_89 : f32 to vector<8x32xf32>
    %306 = arith.select %304, %293, %305 : vector<8x32xi1>, vector<8x32xf32>
    %c48_90 = arith.constant 48 : index
    %c0_91 = arith.constant 0 : index
    %307 = vector.load %arg6[%c48_90, %c0_91] : memref<64x32xf32, #tpu.memory_space<vmem>>, vector<8x32xf32>
    tpu.vector_store %arg6[%c48_90, %c0_91], %306 {strides = array<i32>} : memref<64x32xf32, #tpu.memory_space<vmem>>, vector<8x32xf32>,
    %c56 = arith.constant 56 : index
    %c0_92 = arith.constant 0 : index
    %308 = vector.load %arg7[%c56, %c0_92] : memref<64x128xf32, #tpu.memory_space<vmem>>, vector<8x128xf32>
    %cst_93 = arith.constant dense<0.000000e+00> : vector<8x128xf32>
    %309 = tpu.matmul %299, %11, %cst_93 {dimension_numbers = #tpu.dot_dimension_numbers<[1], [0], [0], [1], [0, 0, 1, 1], [], []>} : vector<8x32xf32>, vector<32x128xf32>, vector<8x128xf32> -> vector<8x128xf32>
    %310 = arith.addf %308, %309 : vector<8x128xf32>
    %311 = vector.extract_strided_slice %310 {offsets = [0, 0], sizes = [8, 32], strides = [1, 1]} : vector<8x128xf32> to vector<8x32xf32>
    %312 = arith.negf %311 : vector<8x32xf32>
    %313 = math.exp %312 : vector<8x32xf32>
    %cst_94 = arith.constant 1.000000e+00 : f32
    %314 = vector.broadcast %cst_94 : f32 to vector<8x32xf32>
    %315 = arith.addf %314, %313 : vector<8x32xf32>
    %316 = arith.divf %314, %315 : vector<8x32xf32>
    %317 = vector.extract_strided_slice %310 {offsets = [0, 32], sizes = [8, 32], strides = [1, 1]} : vector<8x128xf32> to vector<8x32xf32>
    %318 = arith.negf %317 : vector<8x32xf32>
    %319 = math.exp %318 : vector<8x32xf32>
    %cst_95 = arith.constant 1.000000e+00 : f32
    %320 = vector.broadcast %cst_95 : f32 to vector<8x32xf32>
    %321 = arith.addf %320, %319 : vector<8x32xf32>
    %322 = arith.divf %320, %321 : vector<8x32xf32>
    %323 = vector.extract_strided_slice %310 {offsets = [0, 64], sizes = [8, 32], strides = [1, 1]} : vector<8x128xf32> to vector<8x32xf32>
    %324 = math.tanh %323 : vector<8x32xf32>
    %325 = vector.extract_strided_slice %310 {offsets = [0, 96], sizes = [8, 32], strides = [1, 1]} : vector<8x128xf32> to vector<8x32xf32>
    %326 = arith.negf %325 : vector<8x32xf32>
    %327 = math.exp %326 : vector<8x32xf32>
    %cst_96 = arith.constant 1.000000e+00 : f32
    %328 = vector.broadcast %cst_96 : f32 to vector<8x32xf32>
    %329 = arith.addf %328, %327 : vector<8x32xf32>
    %330 = arith.divf %328, %329 : vector<8x32xf32>
    %331 = arith.mulf %322, %302 : vector<8x32xf32>
    %332 = arith.mulf %316, %324 : vector<8x32xf32>
    %333 = arith.addf %331, %332 : vector<8x32xf32>
    %334 = math.tanh %333 : vector<8x32xf32>
    %335 = arith.mulf %330, %334 : vector<8x32xf32>
    %c56_97 = arith.constant 56 : index
    %c0_98 = arith.constant 0 : index
    %336 = vector.load %arg2[%c56_97, %c0_98] : memref<64x1xf32, #tpu.memory_space<vmem>>, vector<8x1xf32>
    %cst_99 = arith.constant 0.000000e+00 : f32
    %337 = vector.broadcast %cst_99 : f32 to vector<8x1xf32>
    %338 = arith.cmpf ogt, %336, %337 : vector<8x1xf32>
    %339 = vector.shape_cast %338 : vector<8x1xi1> to vector<8x1xi1>
    %340 = vector.broadcast %339 : vector<8x1xi1> to vector<8x32xi1>
    %341 = arith.select %340, %335, %299 : vector<8x32xi1>, vector<8x32xf32>
    %342 = vector.shape_cast %338 : vector<8x1xi1> to vector<8x1xi1>
    %343 = vector.broadcast %342 : vector<8x1xi1> to vector<8x32xi1>
    %344 = arith.select %343, %333, %302 : vector<8x32xi1>, vector<8x32xf32>
    %cst_100 = arith.constant 0.000000e+00 : f32
    %345 = vector.shape_cast %338 : vector<8x1xi1> to vector<8x1xi1>
    %346 = vector.broadcast %345 : vector<8x1xi1> to vector<8x32xi1>
    %347 = vector.broadcast %cst_100 : f32 to vector<8x32xf32>
    %348 = arith.select %346, %335, %347 : vector<8x32xi1>, vector<8x32xf32>
    %c56_101 = arith.constant 56 : index
    %c0_102 = arith.constant 0 : index
    %349 = vector.load %arg6[%c56_101, %c0_102] : memref<64x32xf32, #tpu.memory_space<vmem>>, vector<8x32xf32>
    tpu.vector_store %arg6[%c56_101, %c0_102], %348 {strides = array<i32>} : memref<64x32xf32, #tpu.memory_space<vmem>>, vector<8x32xf32>,
    %c0_103 = arith.constant 0 : index
    %c0_104 = arith.constant 0 : index
    %350 = vector.load %arg8[%c0_103, %c0_104] : memref<8x32xf32, #tpu.memory_space<vmem>>, vector<8x32xf32>
    tpu.vector_store %arg8[%c0_103, %c0_104], %341 {strides = array<i32>} : memref<8x32xf32, #tpu.memory_space<vmem>>, vector<8x32xf32>,
    %c0_105 = arith.constant 0 : index
    %c0_106 = arith.constant 0 : index
    %351 = vector.load %arg9[%c0_105, %c0_106] : memref<8x32xf32, #tpu.memory_space<vmem>>, vector<8x32xf32>
    tpu.vector_store %arg9[%c0_105, %c0_106], %344 {strides = array<i32>} : memref<8x32xf32, #tpu.memory_space<vmem>>, vector<8x32xf32>,
    return
  }
  func.func @transform_0(%arg0: i32) -> (i32, i32) {
    %c0_i32 = arith.constant 0 : i32
    %c0_i32_0 = arith.constant 0 : i32
    return %arg0, %c0_i32 : i32, i32
  }
  func.func @transform_1(%arg0: i32) -> (i32, i32) {
    %c0_i32 = arith.constant 0 : i32
    %c0_i32_0 = arith.constant 0 : i32
    return %arg0, %c0_i32 : i32, i32
  }
  func.func @transform_2(%arg0: i32) -> (i32, i32) {
    %c0_i32 = arith.constant 0 : i32
    %c0_i32_0 = arith.constant 0 : i32
    %c0_i32_1 = arith.constant 0 : i32
    return %c0_i32, %c0_i32_0 : i32, i32
  }
  func.func @transform_3(%arg0: i32) -> (i32, i32) {
    %c0_i32 = arith.constant 0 : i32
    %c0_i32_0 = arith.constant 0 : i32
    %c0_i32_1 = arith.constant 0 : i32
    return %c0_i32, %c0_i32_0 : i32, i32
  }
  func.func @transform_4(%arg0: i32) -> (i32, i32) {
    %c0_i32 = arith.constant 0 : i32
    %c0_i32_0 = arith.constant 0 : i32
    %c0_i32_1 = arith.constant 0 : i32
    return %c0_i32, %c0_i32_0 : i32, i32
  }
  func.func @transform_5(%arg0: i32) -> (i32, i32) {
    %c0_i32 = arith.constant 0 : i32
    %c0_i32_0 = arith.constant 0 : i32
    return %arg0, %c0_i32 : i32, i32
  }
}

</mosaic_0001>

<llo_original>
// kernel: batch_rnn_forward.2
$region0: #{batch_rnn_forward.2}
  #allocation0 [shape = 'u32[]', space=smem, size = 0x4, offset = 0x4, fixed_abs, tag = 'smem constant byte address 0x4 - core index']
  #allocation1 [shape = 'u32[144,128]{1,0:T(1,128)}', space=vmem, size = 0x12000, scoped, tag = 'internal scratch']
  %s0 = inlined_call_operand.vmem [shape: f32[64,16], index: 0, kind: input, shape index: {}]
  %s1 = inlined_call_operand.vmem [shape: f32[64,1], index: 1, kind: input, shape index: {}]
  %s2 = inlined_call_operand.vmem [shape: f32[1,16], index: 2, kind: output, shape index: {0}]
  %s3 = inlined_call_operand.vmem [shape: f32[1,16], index: 3, kind: output, shape index: {1}]
  %4 = xla_tuple %s2, %s3
  %s5 = sld [smem:[#allocation0]]
  $region30: #{batch_rnn_forward.2} parent=0
    _
  %s7 = ssub.s32 1, %s5
  %s8 = scalar_select 0, %s7, %s5
  // Predicated region
  $region2: #{batch_rnn_forward.2} parent=0 // pred_check
    _
  $region3: #{batch_rnn_forward.2} parent=0 // pred_check_branch
    %10 = sbr.rel (0) target = $region5
  $region4: #{batch_rnn_forward.2} parent=0 // pred_region
    _
  $region5: #{batch_rnn_forward.2} parent=0 // pred_fallthru
    _
  // Predicated region
  $region6: #{batch_rnn_forward.2} parent=0 // pred_check
    _
  $region7: #{batch_rnn_forward.2} parent=0 // pred_check_branch
    %12 = sbr.rel (0) target = $region9
  $region8: #{batch_rnn_forward.2} parent=0 // pred_region
    _
  $region9: #{batch_rnn_forward.2} parent=0 // pred_fallthru
    _
  %p13 = scmp.eq.s32.totalorder 0, 0
  // Predicated region
  $region10: #{batch_rnn_forward.2} parent=0 // pred_check
    %p14 = pneg %p13
  $region11: #{batch_rnn_forward.2} parent=0 // pred_check_branch
    %16 = sbr.rel (%p14) target = $region13
  $region12: #{batch_rnn_forward.2} parent=0 // pred_region
    %vm17 = vcmask 122880
    %18 = vst.msk [vmem:[%s2] sm:$0x1] %vm17, 0.0
    %19 = vst.msk [vmem:[%s3] sm:$0x1] %vm17, 0.0
  $region13: #{batch_rnn_forward.2} parent=0 // pred_fallthru
    _
  %v20 = vld [vmem:[%s0] sm:$0xff]
  %v21 = vld [vmem:[%s0 + $0x8] sm:$0xff]
  %v22 = vld [vmem:[%s0 + $0x10] sm:$0xff]
  %v23 = vld [vmem:[%s0 + $0x18] sm:$0xff]
  %v24 = vld [vmem:[%s0 + $0x20] sm:$0xff]
  %v25 = vld [vmem:[%s0 + $0x28] sm:$0xff]
  %v26 = vld [vmem:[%s0 + $0x30] sm:$0xff]
  %v27 = vld [vmem:[%s0 + $0x38] sm:$0xff]
  %v28 = vld [vmem:[%s1] sm:$0xff]
  %v29 = vld [vmem:[%s1 + $0x8] sm:$0xff]
  %v30 = vld [vmem:[%s1 + $0x10] sm:$0xff]
  %v31 = vld [vmem:[%s1 + $0x18] sm:$0xff]
  %v32 = vld [vmem:[%s1 + $0x20] sm:$0xff]
  %v33 = vld [vmem:[%s1 + $0x28] sm:$0xff]
  %v34 = vld [vmem:[%s1 + $0x30] sm:$0xff]
  %v35 = vld [vmem:[%s1 + $0x38] sm:$0xff]
  %37 = vset.pattern.permute.xlu0 0
  %38 = vperm.xlu0 %37, %v28
  %v39 = vpop.permute.xlu0 %38
  %42 = vset.pattern.permute.xlu0 0
  %43 = vperm.xlu0 %42, %v29
  %v44 = vpop.permute.xlu0 %43
  %47 = vset.pattern.permute.xlu0 0
  %48 = vperm.xlu0 %47, %v30
  %v49 = vpop.permute.xlu0 %48
  %52 = vset.pattern.permute.xlu0 0
  %53 = vperm.xlu0 %52, %v31
  %v54 = vpop.permute.xlu0 %53
  %57 = vset.pattern.permute.xlu0 0
  %58 = vperm.xlu0 %57, %v32
  %v59 = vpop.permute.xlu0 %58
  %62 = vset.pattern.permute.xlu0 0
  %63 = vperm.xlu0 %62, %v33
  %v64 = vpop.permute.xlu0 %63
  %67 = vset.pattern.permute.xlu0 0
  %68 = vperm.xlu0 %67, %v34
  %v69 = vpop.permute.xlu0 %68
  %72 = vset.pattern.permute.xlu0 0
  %73 = vperm.xlu0 %72, %v35
  %v74 = vpop.permute.xlu0 %73
  %v76 = vmul.f32 %v20, %v39
  %v77 = vmul.f32 %v21, %v44
  %v78 = vmul.f32 %v22, %v49
  %v79 = vmul.f32 %v23, %v54
  %v80 = vmul.f32 %v24, %v59
  %v81 = vmul.f32 %v25, %v64
  %v82 = vmul.f32 %v26, %v69
  %v83 = vmul.f32 %v27, %v74
  %v84 = vld [vmem:[%s2] sm:$0x1]
  %vm85 = vcmask 130048
  %v86 = vsel %vm85, %v76, 0.0
  %v87 = vsel %vm85, %v77, 0.0
  %v88 = vadd.f32 %v86, %v87
  %v89 = vsel %vm85, %v78, 0.0
  %v90 = vadd.f32 %v88, %v89
  %v91 = vsel %vm85, %v79, 0.0
  %v92 = vadd.f32 %v90, %v91
  %v93 = vsel %vm85, %v80, 0.0
  %v94 = vadd.f32 %v92, %v93
  %v95 = vsel %vm85, %v81, 0.0
  %v96 = vadd.f32 %v94, %v95
  %v97 = vsel %vm85, %v82, 0.0
  %v98 = vadd.f32 %v96, %v97
  %v99 = vsel %vm85, %v83, 0.0
  %v100 = vadd.f32 %v98, %v99
  %v101 = vrot.slane %v100, 4
  %v102 = vadd.f32 %v100, %v101
  %v103 = vrot.slane %v102, 2
  %v104 = vadd.f32 %v102, %v103
  %v105 = vrot.slane %v104, 1
  %v106 = vadd.f32 %v104, %v105
  %v107 = vadd.f32 %v84, %v106
  %vm108 = vcmask 122880
  %109 = vst.msk [vmem:[%s2] sm:$0x1] %vm108, %v107
  %v110 = vld [vmem:[%s3] sm:$0x1]
  %v111 = vmul.f32 %v76, %v20
  %v112 = vmul.f32 %v77, %v21
  %v113 = vmul.f32 %v78, %v22
  %v114 = vmul.f32 %v79, %v23
  %v115 = vmul.f32 %v80, %v24
  %v116 = vmul.f32 %v81, %v25
  %v117 = vmul.f32 %v82, %v26
  %v118 = vmul.f32 %v83, %v27
  %v119 = vsel %vm85, %v111, 0.0
  %v120 = vsel %vm85, %v112, 0.0
  %v121 = vadd.f32 %v119, %v120
  %v122 = vsel %vm85, %v113, 0.0
  %v123 = vadd.f32 %v121, %v122
  %v124 = vsel %vm85, %v114, 0.0
  %v125 = vadd.f32 %v123, %v124
  %v126 = vsel %vm85, %v115, 0.0
  %v127 = vadd.f32 %v125, %v126
  %v128 = vsel %vm85, %v116, 0.0
  %v129 = vadd.f32 %v127, %v128
  %v130 = vsel %vm85, %v117, 0.0
  %v131 = vadd.f32 %v129, %v130
  %v132 = vsel %vm85, %v118, 0.0
  %v133 = vadd.f32 %v131, %v132
  %v134 = vrot.slane %v133, 4
  %v135 = vadd.f32 %v133, %v134
  %v136 = vrot.slane %v135, 2
  %v137 = vadd.f32 %v135, %v136
  %v138 = vrot.slane %v137, 1
  %v139 = vadd.f32 %v137, %v138
  %v140 = vadd.f32 %v110, %v139
  %141 = vst.msk [vmem:[%s3] sm:$0x1] %vm108, %v140
  // Predicated region
  $region14: #{batch_rnn_forward.2} parent=0 // pred_check
    _
  $region15: #{batch_rnn_forward.2} parent=0 // pred_check_branch
    %143 = sbr.rel (0) target = $region17
  $region16: #{batch_rnn_forward.2} parent=0 // pred_region
    _
  $region17: #{batch_rnn_forward.2} parent=0 // pred_fallthru
    _
  // Predicated region
  $region18: #{batch_rnn_forward.2} parent=0 // pred_check
    _
  $region19: #{batch_rnn_forward.2} parent=0 // pred_check_branch
    %145 = sbr.rel (0) target = $region21
  $region20: #{batch_rnn_forward.2} parent=0 // pred_region
    _
  $region21: #{batch_rnn_forward.2} parent=0 // pred_fallthru
    _
  // Predicated region
  $region22: #{batch_rnn_forward.2} parent=0 // pred_check
    _
  $region23: #{batch_rnn_forward.2} parent=0 // pred_check_branch
    %147 = sbr.rel (0) target = $region25
  $region24: #{batch_rnn_forward.2} parent=0 // pred_region
    _
  $region25: #{batch_rnn_forward.2} parent=0 // pred_fallthru
    _
  // Predicated region
  $region26: #{batch_rnn_forward.2} parent=0 // pred_check
    _
  $region27: #{batch_rnn_forward.2} parent=0 // pred_check_branch
    %149 = sbr.rel (0) target = $region29
  $region28: #{batch_rnn_forward.2} parent=0 // pred_region
    _
  $region29: #{batch_rnn_forward.2} parent=0 // pred_fallthru
    _

// kernel: batch_rnn_forward.3
$region0: #{batch_rnn_forward.3}
  #allocation0 [shape = 'u32[]', space=smem, size = 0x4, offset = 0x4, fixed_abs, tag = 'smem constant byte address 0x4 - core index']
  #allocation1 [shape = 'u32[144,128]{1,0:T(1,128)}', space=vmem, size = 0x12000, scoped, tag = 'internal scratch']
  #allocation2 [shape = 'f32[64,128]{1,0:T(8,128)}', space=vmem, size = 0x8000, scoped, tag = 'scratch operand']
  #allocation3 [shape = 'f32[8,32]{1,0:T(8,128)}', space=vmem, size = 0x1000, scoped, tag = 'scratch operand']
  #allocation4 [shape = 'f32[8,32]{1,0:T(8,128)}', space=vmem, size = 0x1000, scoped, tag = 'scratch operand']
  %s0 = inlined_call_operand.vmem [shape: f32[64,16], index: 0, kind: input, shape index: {}]
  %s1 = inlined_call_operand.vmem [shape: f32[64,1], index: 1, kind: input, shape index: {}]
  %s2 = inlined_call_operand.vmem [shape: bf16[16,128], index: 2, kind: input, shape index: {}]
  %s3 = inlined_call_operand.vmem [shape: f32[1,128], index: 3, kind: input, shape index: {}]
  %s4 = inlined_call_operand.vmem [shape: f32[32,128], index: 4, kind: input, shape index: {}]
  %s5 = inlined_call_operand.vmem [shape: f32[64,32], index: 5, kind: output, shape index: {}]
  %s6 = sld [smem:[#allocation0]]
  $region34: #{batch_rnn_forward.3} parent=0
    _
  %s8 = ssub.s32 1, %s6
  %s9 = scalar_select 0, %s8, %s6
  // Predicated region
  $region2: #{batch_rnn_forward.3} parent=0 // pred_check
    _
  $region3: #{batch_rnn_forward.3} parent=0 // pred_check_branch
    %11 = sbr.rel (0) target = $region5
  $region4: #{batch_rnn_forward.3} parent=0 // pred_region
    _
  $region5: #{batch_rnn_forward.3} parent=0 // pred_fallthru
    _
  // Predicated region
  $region6: #{batch_rnn_forward.3} parent=0 // pred_check
    _
  $region7: #{batch_rnn_forward.3} parent=0 // pred_check_branch
    %13 = sbr.rel (0) target = $region9
  $region8: #{batch_rnn_forward.3} parent=0 // pred_region
    _
  $region9: #{batch_rnn_forward.3} parent=0 // pred_fallthru
    _
  // Predicated region
  $region10: #{batch_rnn_forward.3} parent=0 // pred_check
    _
  $region11: #{batch_rnn_forward.3} parent=0 // pred_check_branch
    %15 = sbr.rel (0) target = $region13
  $region12: #{batch_rnn_forward.3} parent=0 // pred_region
    _
  $region13: #{batch_rnn_forward.3} parent=0 // pred_fallthru
    _
  // Predicated region
  $region14: #{batch_rnn_forward.3} parent=0 // pred_check
    _
  $region15: #{batch_rnn_forward.3} parent=0 // pred_check_branch
    %17 = sbr.rel (0) target = $region17
  $region16: #{batch_rnn_forward.3} parent=0 // pred_region
    _
  $region17: #{batch_rnn_forward.3} parent=0 // pred_fallthru
    _
  // Predicated region
  $region18: #{batch_rnn_forward.3} parent=0 // pred_check
    _
  $region19: #{batch_rnn_forward.3} parent=0 // pred_check_branch
    %19 = sbr.rel (0) target = $region21
  $region20: #{batch_rnn_forward.3} parent=0 // pred_region
    _
  $region21: #{batch_rnn_forward.3} parent=0 // pred_fallthru
    _
  %p21 = scmp.eq.s32.totalorder 0, 0
  // Predicated region
  $region22: #{batch_rnn_forward.3} parent=0 // pred_check
    %p22 = pneg %p21
  $region23: #{batch_rnn_forward.3} parent=0 // pred_check_branch
    %24 = sbr.rel (%p22) target = $region25
  $region24: #{batch_rnn_forward.3} parent=0 // pred_region
    %vm25 = vcmask 261120
    %26 = vst.msk [vmem:[#allocation3] sm:$0xff] %vm25, 0.0
    %27 = vst.msk [vmem:[#allocation4] sm:$0xff] %vm25, 0.0
  $region25: #{batch_rnn_forward.3} parent=0 // pred_fallthru
    _
  %v28 = vld [vmem:[%s0] sm:$0xff]
  %v29 = vld [vmem:[%s0 + $0x8] sm:$0xff]
  %v30 = vld [vmem:[%s0 + $0x10] sm:$0xff]
  %v31 = vld [vmem:[%s0 + $0x18] sm:$0xff]
  %v32 = vld [vmem:[%s0 + $0x20] sm:$0xff]
  %v33 = vld [vmem:[%s0 + $0x28] sm:$0xff]
  %v34 = vld [vmem:[%s0 + $0x30] sm:$0xff]
  %v35 = vld [vmem:[%s0 + $0x38] sm:$0xff]
  %v36 = vpack.c.bf16 %v29, %v28
  %v37 = vpack.c.bf16 %v31, %v30
  %v38 = vpack.c.bf16 %v33, %v32
  %v39 = vpack.c.bf16 %v35, %v34
  %v40 = vld [vmem:[%s2] sm:$0xf]
  %v41 = vld [vmem:[%s2 + $0x4] sm:$0xf]
  %v42 = vld [vmem:[%s3] sm:$0x1]
  %v44 = vlaneseq
  %v45 = vshrl.u32 %v44, 7
  %v46 = vsub.s32 0, %v45
  %v47 = vrot.slane %v42, %v46
  %v51 = vunpack.c.l.b16 %v40
  %v52 = vunpack.c.l.b16 %v41
  %v53 = vpack.c.b16 %v52, %v51
  %vm55 = vcmask 130048
  %v57 = vsel %vm55, %v36, 0
  %v60 = vsel %vm55, %v37, 0
  %v63 = vsel %vm55, %v38, 0
  %v66 = vsel %vm55, %v39, 0
  %68 = vmatprep.subr.bf16.mxu0 0
  %69 = vmatpush1.bf16.msra.mxu0 %v53
  %70 = vmatprep.subr.bf16.mxu0 0
  %71 = vmatpush1.bf16.msra.mxu0 0
  %72 = vmatprep.subr.bf16.mxu0 0
  %73 = vmatpush1.bf16.msra.mxu0 0
  %74 = vmatprep.subr.bf16.mxu0 0
  %75 = vmatpush1.bf16.msra.mxu0 0
  %76 = vmatprep.subr.bf16.mxu0 0
  %77 = vmatpush1.bf16.msra.mxu0 0
  %78 = vmatprep.subr.bf16.mxu0 0
  %79 = vmatpush1.bf16.msra.mxu0 0
  %80 = vmatprep.subr.bf16.mxu0 0
  %81 = vmatpush1.bf16.msra.mxu0 0
  %82 = vmatprep.subr.bf16.mxu0 0
  %83 = vmatpush1.bf16.msra.mxu0 0
  %84 = vmatprep.subr.bf16.mxu0 0
  %85 = vmatpush1.bf16.msra.mxu0 0
  %86 = vmatprep.subr.bf16.mxu0 0
  %87 = vmatpush1.bf16.msra.mxu0 0
  %88 = vmatprep.subr.bf16.mxu0 0
  %89 = vmatpush1.bf16.msra.mxu0 0
  %90 = vmatprep.subr.bf16.mxu0 0
  %91 = vmatpush1.bf16.msra.mxu0 0
  %92 = vmatprep.subr.bf16.mxu0 0
  %93 = vmatpush1.bf16.msra.mxu0 0
  %94 = vmatprep.subr.bf16.mxu0 0
  %95 = vmatpush1.bf16.msra.mxu0 0
  %96 = vmatprep.subr.bf16.mxu0 0
  %97 = vmatpush1.bf16.msra.mxu0 0
  %98 = vmatprep.subr.bf16.mxu0 0
  %99 = vmatpush1.bf16.msra.mxu0 0
  %100 = vmatprep.mubr.bf16.mxu0 0
  %101 = vmatmul.mubr.bf16.gmra.mrb[0].mxu0 %v57
  %v102 = vpop.f32.mrb[0].mxu0
  %v103 = vadd.f32 %v47, %v102
  %v104 = vpop.f32.mrb[0].mxu0
  %v105 = vpop.f32.mrb[0].mxu0
  %v106 = vadd.f32 %v47, %v105
  %v107 = vpop.f32.mrb[0].mxu0
  %108 = vmatprep.mubr.bf16.mxu0 0
  %109 = vmatmul.mubr.bf16.gmra.mrb[0].mxu0 %v60
  %v110 = vpop.f32.mrb[0].mxu0
  %v111 = vadd.f32 %v47, %v110
  %v112 = vpop.f32.mrb[0].mxu0
  %v113 = vpop.f32.mrb[0].mxu0
  %v114 = vadd.f32 %v47, %v113
  %v115 = vpop.f32.mrb[0].mxu0
  %116 = vmatprep.mubr.bf16.mxu0 0
  %117 = vmatmul.mubr.bf16.gmra.mrb[0].mxu0 %v63
  %v118 = vpop.f32.mrb[0].mxu0
  %v119 = vadd.f32 %v47, %v118
  %v120 = vpop.f32.mrb[0].mxu0
  %v121 = vpop.f32.mrb[0].mxu0
  %v122 = vadd.f32 %v47, %v121
  %v123 = vpop.f32.mrb[0].mxu0
  %124 = vmatprep.mubr.bf16.mxu0 0
  %125 = vmatmul.mubr.bf16.gmra.mrb[0].mxu0 %v66
  %v126 = vpop.f32.mrb[0].mxu0
  %v127 = vadd.f32 %v47, %v126
  %v128 = vpop.f32.mrb[0].mxu0
  %v129 = vpop.f32.mrb[0].mxu0
  %v130 = vadd.f32 %v47, %v129
  %v131 = vpop.f32.mrb[0].mxu0
  %132 = vdwg.mxu0
  %133 = vst [vmem:[#allocation2] sm:$0xff] %v103
  %134 = vst [vmem:[#allocation2 + $0x8] sm:$0xff] %v106
  %135 = vst [vmem:[#allocation2 + $0x10] sm:$0xff] %v111
  %136 = vst [vmem:[#allocation2 + $0x18] sm:$0xff] %v114
  %137 = vst [vmem:[#allocation2 + $0x20] sm:$0xff] %v119
  %138 = vst [vmem:[#allocation2 + $0x28] sm:$0xff] %v122
  %139 = vst [vmem:[#allocation2 + $0x30] sm:$0xff] %v127
  %140 = vst [vmem:[#allocation2 + $0x38] sm:$0xff] %v130
  %v141 = vld [vmem:[%s4] sm:$0xff]
  %v142 = vld [vmem:[%s4 + $0x8] sm:$0xff]
  %v143 = vld [vmem:[%s4 + $0x10] sm:$0xff]
  %v144 = vld [vmem:[%s4 + $0x18] sm:$0xff]
  %v145 = vld [vmem:[#allocation3] sm:$0xff]
  %v146 = vld [vmem:[#allocation4] sm:$0xff]
  %v147 = vld [vmem:[#allocation2] sm:$0xff]
  %vm148 = vcmask 261120
  %v150 = vsel %vm148, %v145, 0
  %152 = vmatprep.subr.mxu0 0.0
  %153 = vmatpush1.msra.mxu0 %v141
  %154 = vmatprep.subr.mxu0 0.0
  %155 = vmatpush1.msra.mxu0 %v142
  %156 = vmatprep.subr.mxu0 0.0
  %157 = vmatpush1.msra.mxu0 %v143
  %158 = vmatprep.subr.mxu0 0.0
  %159 = vmatpush1.msra.mxu0 %v144
  %160 = vmatprep.subr.mxu0 0.0
  %161 = vmatpush1.msra.mxu0 0.0
  %162 = vmatprep.subr.mxu0 0.0
  %163 = vmatpush1.msra.mxu0 0.0
  %164 = vmatprep.subr.mxu0 0.0
  %165 = vmatpush1.msra.mxu0 0.0
  %166 = vmatprep.subr.mxu0 0.0
  %167 = vmatpush1.msra.mxu0 0.0
  %168 = vmatprep.subr.mxu0 0.0
  %169 = vmatpush1.msra.mxu0 0.0
  %170 = vmatprep.subr.mxu0 0.0
  %171 = vmatpush1.msra.mxu0 0.0
  %172 = vmatprep.subr.mxu0 0.0
  %173 = vmatpush1.msra.mxu0 0.0
  %174 = vmatprep.subr.mxu0 0.0
  %175 = vmatpush1.msra.mxu0 0.0
  %176 = vmatprep.subr.mxu0 0.0
  %177 = vmatpush1.msra.mxu0 0.0
  %178 = vmatprep.subr.mxu0 0.0
  %179 = vmatpush1.msra.mxu0 0.0
  %180 = vmatprep.subr.mxu0 0.0
  %181 = vmatpush1.msra.mxu0 0.0
  %182 = vmatprep.subr.mxu0 0.0
  %183 = vmatpush1.msra.mxu0 0.0
  %184 = vmatprep.subr.mxu0 0.0
  %185 = vmatpush1.msra.mxu0 0.0
  %186 = vmatprep.subr.mxu0 0.0
  %187 = vmatpush1.msra.mxu0 0.0
  %188 = vmatprep.subr.mxu0 0.0
  %189 = vmatpush1.msra.mxu0 0.0
  %190 = vmatprep.subr.mxu0 0.0
  %191 = vmatpush1.msra.mxu0 0.0
  %192 = vmatprep.subr.mxu0 0.0
  %193 = vmatpush1.msra.mxu0 0.0
  %194 = vmatprep.subr.mxu0 0.0
  %195 = vmatpush1.msra.mxu0 0.0
  %196 = vmatprep.subr.mxu0 0.0
  %197 = vmatpush1.msra.mxu0 0.0
  %198 = vmatprep.subr.mxu0 0.0
  %199 = vmatpush1.msra.mxu0 0.0
  %200 = vmatprep.subr.mxu0 0.0
  %201 = vmatpush1.msra.mxu0 0.0
  %202 = vmatprep.subr.mxu0 0.0
  %203 = vmatpush1.msra.mxu0 0.0
  %204 = vmatprep.subr.mxu0 0.0
  %205 = vmatpush1.msra.mxu0 0.0
  %206 = vmatprep.subr.mxu0 0.0
  %207 = vmatpush1.msra.mxu0 0.0
  %208 = vmatprep.subr.mxu0 0.0
  %209 = vmatpush1.msra.mxu0 0.0
  %210 = vmatprep.subr.mxu0 0.0
  %211 = vmatpush1.msra.mxu0 0.0
  %212 = vmatprep.subr.mxu0 0.0
  %213 = vmatpush1.msra.mxu0 0.0
  %214 = vmatprep.subr.mxu0 0.0
  %215 = vmatpush1.msra.mxu0 0.0
  %216 = vmatprep.mubr.f32.mxu0 0.0
  %217 = vmatmul.mubr.f32.gmra.mrb[0].mxu0 %v150
  %v218 = vpop.f32.mrb[0].mxu0
  %v219 = vadd.f32 0.0, %v218
  %v220 = vpop.f32.mrb[0].mxu0
  %221 = vdwg.mxu0
  %v222 = vadd.f32 %v147, %v219
  %v223 = vxor.u32 %v222, 2147483648
  %v224 = vmul.f32 %v223, 1.442695
  %v225 = vpow.pop %v224
  %v226 = vadd.f32 %v225, 1.0
  %v227 = vrcp.pop %v226
  %v228 = vmul.f32 1.0, %v227
  %v229 = vtanh.pop %v222
  %231 = vrot.lane.b32.xlu0 %v146, 32
  %v232 = vpop.permute.xlu0 %231
  %v234 = vmul.f32 %v228, %v232
  %236 = vrot.lane.b32.xlu0 %v229, 64
  %v237 = vpop.permute.xlu0 %236
  %v239 = vmul.f32 %v228, %v237
  %241 = vrot.lane.b32.xlu0 %v239, 32
  %v242 = vpop.permute.xlu0 %241
  %v244 = vadd.f32 %v234, %v242
  %v245 = vtanh.pop %v244
  %247 = vrot.lane.b32.xlu0 %v245, 64
  %v248 = vpop.permute.xlu0 %247
  %v250 = vmul.f32 %v228, %v248
  %v251 = vld [vmem:[%s1] sm:$0xff]
  %vm252 = vcmp.gt.f32.partialorder %v251, 0.0
  %v253 = vsel %vm252, 1, 0
  %254 = vset.pattern.permute.xlu0 0
  %255 = vperm.xlu0 %254, %v253
  %v256 = vpop.permute.xlu0 %255
  %vm257 = vcmp.eq.s32.totalorder %v256, 1
  %258 = vrot.lane.b32.xlu0 %v145, 96
  %v259 = vpop.permute.xlu0 %258
  %v261 = vsel %vm257, %v250, %v259
  %v262 = vsel %vm257, %v244, %v232
  %v263 = vsel %vm257, %v250, 0.0
  %265 = vrot.lane.b32.xlu0 %v263, 32
  %v266 = vpop.permute.xlu0 %265
  %268 = vst.msk [vmem:[%s5] sm:$0xff] %vm148, %v266
  %v269 = vld [vmem:[#allocation2 + $0x8] sm:$0xff]
  %271 = vrot.lane.b32.xlu0 %v261, 32
  %v272 = vpop.permute.xlu0 %271
  %v273 = vsel %vm148, %v272, 0
  %275 = vmatprep.subr.mxu0 0.0
  %276 = vmatpush1.msra.mxu0 %v141
  %277 = vmatprep.subr.mxu0 0.0
  %278 = vmatpush1.msra.mxu0 %v142
  %279 = vmatprep.subr.mxu0 0.0
  %280 = vmatpush1.msra.mxu0 %v143
  %281 = vmatprep.subr.mxu0 0.0
  %282 = vmatpush1.msra.mxu0 %v144
  %283 = vmatprep.subr.mxu0 0.0
  %284 = vmatpush1.msra.mxu0 0.0
  %285 = vmatprep.subr.mxu0 0.0
  %286 = vmatpush1.msra.mxu0 0.0
  %287 = vmatprep.subr.mxu0 0.0
  %288 = vmatpush1.msra.mxu0 0.0
  %289 = vmatprep.subr.mxu0 0.0
  %290 = vmatpush1.msra.mxu0 0.0
  %291 = vmatprep.subr.mxu0 0.0
  %292 = vmatpush1.msra.mxu0 0.0
  %293 = vmatprep.subr.mxu0 0.0
  %294 = vmatpush1.msra.mxu0 0.0
  %295 = vmatprep.subr.mxu0 0.0
  %296 = vmatpush1.msra.mxu0 0.0
  %297 = vmatprep.subr.mxu0 0.0
  %298 = vmatpush1.msra.mxu0 0.0
  %299 = vmatprep.subr.mxu0 0.0
  %300 = vmatpush1.msra.mxu0 0.0
  %301 = vmatprep.subr.mxu0 0.0
  %302 = vmatpush1.msra.mxu0 0.0
  %303 = vmatprep.subr.mxu0 0.0
  %304 = vmatpush1.msra.mxu0 0.0
  %305 = vmatprep.subr.mxu0 0.0
  %306 = vmatpush1.msra.mxu0 0.0
  %307 = vmatprep.subr.mxu0 0.0
  %308 = vmatpush1.msra.mxu0 0.0
  %309 = vmatprep.subr.mxu0 0.0
  %310 = vmatpush1.msra.mxu0 0.0
  %311 = vmatprep.subr.mxu0 0.0
  %312 = vmatpush1.msra.mxu0 0.0
  %313 = vmatprep.subr.mxu0 0.0
  %314 = vmatpush1.msra.mxu0 0.0
  %315 = vmatprep.subr.mxu0 0.0
  %316 = vmatpush1.msra.mxu0 0.0
  %317 = vmatprep.subr.mxu0 0.0
  %318 = vmatpush1.msra.mxu0 0.0
  %319 = vmatprep.subr.mxu0 0.0
  %320 = vmatpush1.msra.mxu0 0.0
  %321 = vmatprep.subr.mxu0 0.0
  %322 = vmatpush1.msra.mxu0 0.0
  %323 = vmatprep.subr.mxu0 0.0
  %324 = vmatpush1.msra.mxu0 0.0
  %325 = vmatprep.subr.mxu0 0.0
  %326 = vmatpush1.msra.mxu0 0.0
  %327 = vmatprep.subr.mxu0 0.0
  %328 = vmatpush1.msra.mxu0 0.0
  %329 = vmatprep.subr.mxu0 0.0
  %330 = vmatpush1.msra.mxu0 0.0
  %331 = vmatprep.subr.mxu0 0.0
  %332 = vmatpush1.msra.mxu0 0.0
  %333 = vmatprep.subr.mxu0 0.0
  %334 = vmatpush1.msra.mxu0 0.0
  %335 = vmatprep.subr.mxu0 0.0
  %336 = vmatpush1.msra.mxu0 0.0
  %337 = vmatprep.subr.mxu0 0.0
  %338 = vmatpush1.msra.mxu0 0.0
  %339 = vmatprep.mubr.f32.mxu0 0.0
  %340 = vmatmul.mubr.f32.gmra.mrb[0].mxu0 %v273
  %v341 = vpop.f32.mrb[0].mxu0
  %v342 = vadd.f32 0.0, %v341
  %v343 = vpop.f32.mrb[0].mxu0
  %344 = vdwg.mxu0
  %v345 = vadd.f32 %v269, %v342
  %v346 = vxor.u32 %v345, 2147483648
  %v347 = vmul.f32 %v346, 1.442695
  %v348 = vpow.pop %v347
  %v349 = vadd.f32 %v348, 1.0
  %v350 = vrcp.pop %v349
  %v351 = vmul.f32 1.0, %v350
  %v352 = vtanh.pop %v345
  %v353 = vmul.f32 %v351, %v262
  %355 = vrot.lane.b32.xlu0 %v352, 64
  %v356 = vpop.permute.xlu0 %355
  %v358 = vmul.f32 %v351, %v356
  %360 = vrot.lane.b32.xlu0 %v358, 32
  %v361 = vpop.permute.xlu0 %360
  %v363 = vadd.f32 %v353, %v361
  %v364 = vtanh.pop %v363
  %366 = vrot.lane.b32.xlu0 %v364, 64
  %v367 = vpop.permute.xlu0 %366
  %v369 = vmul.f32 %v351, %v367
  %v370 = vld [vmem:[%s1 + $0x8] sm:$0xff]
  %vm371 = vcmp.gt.f32.partialorder %v370, 0.0
  %v372 = vsel %vm371, 1, 0
  %373 = vset.pattern.permute.xlu0 0
  %374 = vperm.xlu0 %373, %v372
  %v375 = vpop.permute.xlu0 %374
  %vm376 = vcmp.eq.s32.totalorder %v375, 1
  %v377 = vsel %vm376, %v369, %v261
  %v378 = vsel %vm376, %v363, %v262
  %v379 = vsel %vm376, %v369, 0.0
  %381 = vrot.lane.b32.xlu0 %v379, 32
  %v382 = vpop.permute.xlu0 %381
  %384 = vst.msk [vmem:[%s5 + $0x8] sm:$0xff] %vm148, %v382
  %v385 = vld [vmem:[#allocation2 + $0x10] sm:$0xff]
  %387 = vrot.lane.b32.xlu0 %v377, 32
  %v388 = vpop.permute.xlu0 %387
  %v389 = vsel %vm148, %v388, 0
  %391 = vmatprep.subr.mxu0 0.0
  %392 = vmatpush1.msra.mxu0 %v141
  %393 = vmatprep.subr.mxu0 0.0
  %394 = vmatpush1.msra.mxu0 %v142
  %395 = vmatprep.subr.mxu0 0.0
  %396 = vmatpush1.msra.mxu0 %v143
  %397 = vmatprep.subr.mxu0 0.0
  %398 = vmatpush1.msra.mxu0 %v144
  %399 = vmatprep.subr.mxu0 0.0
  %400 = vmatpush1.msra.mxu0 0.0
  %401 = vmatprep.subr.mxu0 0.0
  %402 = vmatpush1.msra.mxu0 0.0
  %403 = vmatprep.subr.mxu0 0.0
  %404 = vmatpush1.msra.mxu0 0.0
  %405 = vmatprep.subr.mxu0 0.0
  %406 = vmatpush1.msra.mxu0 0.0
  %407 = vmatprep.subr.mxu0 0.0
  %408 = vmatpush1.msra.mxu0 0.0
  %409 = vmatprep.subr.mxu0 0.0
  %410 = vmatpush1.msra.mxu0 0.0
  %411 = vmatprep.subr.mxu0 0.0
  %412 = vmatpush1.msra.mxu0 0.0
  %413 = vmatprep.subr.mxu0 0.0
  %414 = vmatpush1.msra.mxu0 0.0
  %415 = vmatprep.subr.mxu0 0.0
  %416 = vmatpush1.msra.mxu0 0.0
  %417 = vmatprep.subr.mxu0 0.0
  %418 = vmatpush1.msra.mxu0 0.0
  %419 = vmatprep.subr.mxu0 0.0
  %420 = vmatpush1.msra.mxu0 0.0
  %421 = vmatprep.subr.mxu0 0.0
  %422 = vmatpush1.msra.mxu0 0.0
  %423 = vmatprep.subr.mxu0 0.0
  %424 = vmatpush1.msra.mxu0 0.0
  %425 = vmatprep.subr.mxu0 0.0
  %426 = vmatpush1.msra.mxu0 0.0
  %427 = vmatprep.subr.mxu0 0.0
  %428 = vmatpush1.msra.mxu0 0.0
  %429 = vmatprep.subr.mxu0 0.0
  %430 = vmatpush1.msra.mxu0 0.0
  %431 = vmatprep.subr.mxu0 0.0
  %432 = vmatpush1.msra.mxu0 0.0
  %433 = vmatprep.subr.mxu0 0.0
  %434 = vmatpush1.msra.mxu0 0.0
  %435 = vmatprep.subr.mxu0 0.0
  %436 = vmatpush1.msra.mxu0 0.0
  %437 = vmatprep.subr.mxu0 0.0
  %438 = vmatpush1.msra.mxu0 0.0
  %439 = vmatprep.subr.mxu0 0.0
  %440 = vmatpush1.msra.mxu0 0.0
  %441 = vmatprep.subr.mxu0 0.0
  %442 = vmatpush1.msra.mxu0 0.0
  %443 = vmatprep.subr.mxu0 0.0
  %444 = vmatpush1.msra.mxu0 0.0
  %445 = vmatprep.subr.mxu0 0.0
  %446 = vmatpush1.msra.mxu0 0.0
  %447 = vmatprep.subr.mxu0 0.0
  %448 = vmatpush1.msra.mxu0 0.0
  %449 = vmatprep.subr.mxu0 0.0
  %450 = vmatpush1.msra.mxu0 0.0
  %451 = vmatprep.subr.mxu0 0.0
  %452 = vmatpush1.msra.mxu0 0.0
  %453 = vmatprep.subr.mxu0 0.0
  %454 = vmatpush1.msra.mxu0 0.0
  %455 = vmatprep.mubr.f32.mxu0 0.0
  %456 = vmatmul.mubr.f32.gmra.mrb[0].mxu0 %v389
  %v457 = vpop.f32.mrb[0].mxu0
  %v458 = vadd.f32 0.0, %v457
  %v459 = vpop.f32.mrb[0].mxu0
  %460 = vdwg.mxu0
  %v461 = vadd.f32 %v385, %v458
  %v462 = vxor.u32 %v461, 2147483648
  %v463 = vmul.f32 %v462, 1.442695
  %v464 = vpow.pop %v463
  %v465 = vadd.f32 %v464, 1.0
  %v466 = vrcp.pop %v465
  %v467 = vmul.f32 1.0, %v466
  %v468 = vtanh.pop %v461
  %v469 = vmul.f32 %v467, %v378
  %471 = vrot.lane.b32.xlu0 %v468, 64
  %v472 = vpop.permute.xlu0 %471
  %v474 = vmul.f32 %v467, %v472
  %476 = vrot.lane.b32.xlu0 %v474, 32
  %v477 = vpop.permute.xlu0 %476
  %v479 = vadd.f32 %v469, %v477
  %v480 = vtanh.pop %v479
  %482 = vrot.lane.b32.xlu0 %v480, 64
  %v483 = vpop.permute.xlu0 %482
  %v485 = vmul.f32 %v467, %v483
  %v486 = vld [vmem:[%s1 + $0x10] sm:$0xff]
  %vm487 = vcmp.gt.f32.partialorder %v486, 0.0
  %v488 = vsel %vm487, 1, 0
  %489 = vset.pattern.permute.xlu0 0
  %490 = vperm.xlu0 %489, %v488
  %v491 = vpop.permute.xlu0 %490
  %vm492 = vcmp.eq.s32.totalorder %v491, 1
  %v493 = vsel %vm492, %v485, %v377
  %v494 = vsel %vm492, %v479, %v378
  %v495 = vsel %vm492, %v485, 0.0
  %497 = vrot.lane.b32.xlu0 %v495, 32
  %v498 = vpop.permute.xlu0 %497
  %500 = vst.msk [vmem:[%s5 + $0x10] sm:$0xff] %vm148, %v498
  %v501 = vld [vmem:[#allocation2 + $0x18] sm:$0xff]
  %503 = vrot.lane.b32.xlu0 %v493, 32
  %v504 = vpop.permute.xlu0 %503
  %v505 = vsel %vm148, %v504, 0
  %507 = vmatprep.subr.mxu0 0.0
  %508 = vmatpush1.msra.mxu0 %v141
  %509 = vmatprep.subr.mxu0 0.0
  %510 = vmatpush1.msra.mxu0 %v142
  %511 = vmatprep.subr.mxu0 0.0
  %512 = vmatpush1.msra.mxu0 %v143
  %513 = vmatprep.subr.mxu0 0.0
  %514 = vmatpush1.msra.mxu0 %v144
  %515 = vmatprep.subr.mxu0 0.0
  %516 = vmatpush1.msra.mxu0 0.0
  %517 = vmatprep.subr.mxu0 0.0
  %518 = vmatpush1.msra.mxu0 0.0
  %519 = vmatprep.subr.mxu0 0.0
  %520 = vmatpush1.msra.mxu0 0.0
  %521 = vmatprep.subr.mxu0 0.0
  %522 = vmatpush1.msra.mxu0 0.0
  %523 = vmatprep.subr.mxu0 0.0
  %524 = vmatpush1.msra.mxu0 0.0
  %525 = vmatprep.subr.mxu0 0.0
  %526 = vmatpush1.msra.mxu0 0.0
  %527 = vmatprep.subr.mxu0 0.0
  %528 = vmatpush1.msra.mxu0 0.0
  %529 = vmatprep.subr.mxu0 0.0
  %530 = vmatpush1.msra.mxu0 0.0
  %531 = vmatprep.subr.mxu0 0.0
  %532 = vmatpush1.msra.mxu0 0.0
  %533 = vmatprep.subr.mxu0 0.0
  %534 = vmatpush1.msra.mxu0 0.0
  %535 = vmatprep.subr.mxu0 0.0
  %536 = vmatpush1.msra.mxu0 0.0
  %537 = vmatprep.subr.mxu0 0.0
  %538 = vmatpush1.msra.mxu0 0.0
  %539 = vmatprep.subr.mxu0 0.0
  %540 = vmatpush1.msra.mxu0 0.0
  %541 = vmatprep.subr.mxu0 0.0
  %542 = vmatpush1.msra.mxu0 0.0
  %543 = vmatprep.subr.mxu0 0.0
  %544 = vmatpush1.msra.mxu0 0.0
  %545 = vmatprep.subr.mxu0 0.0
  %546 = vmatpush1.msra.mxu0 0.0
  %547 = vmatprep.subr.mxu0 0.0
  %548 = vmatpush1.msra.mxu0 0.0
  %549 = vmatprep.subr.mxu0 0.0
  %550 = vmatpush1.msra.mxu0 0.0
  %551 = vmatprep.subr.mxu0 0.0
  %552 = vmatpush1.msra.mxu0 0.0
  %553 = vmatprep.subr.mxu0 0.0
  %554 = vmatpush1.msra.mxu0 0.0
  %555 = vmatprep.subr.mxu0 0.0
  %556 = vmatpush1.msra.mxu0 0.0
  %557 = vmatprep.subr.mxu0 0.0
  %558 = vmatpush1.msra.mxu0 0.0
  %559 = vmatprep.subr.mxu0 0.0
  %560 = vmatpush1.msra.mxu0 0.0
  %561 = vmatprep.subr.mxu0 0.0
  %562 = vmatpush1.msra.mxu0 0.0
  %563 = vmatprep.subr.mxu0 0.0
  %564 = vmatpush1.msra.mxu0 0.0
  %565 = vmatprep.subr.mxu0 0.0
  %566 = vmatpush1.msra.mxu0 0.0
  %567 = vmatprep.subr.mxu0 0.0
  %568 = vmatpush1.msra.mxu0 0.0
  %569 = vmatprep.subr.mxu0 0.0
  %570 = vmatpush1.msra.mxu0 0.0
  %571 = vmatprep.mubr.f32.mxu0 0.0
  %572 = vmatmul.mubr.f32.gmra.mrb[0].mxu0 %v505
  %v573 = vpop.f32.mrb[0].mxu0
  %v574 = vadd.f32 0.0, %v573
  %v575 = vpop.f32.mrb[0].mxu0
  %576 = vdwg.mxu0
  %v577 = vadd.f32 %v501, %v574
  %v578 = vxor.u32 %v577, 2147483648
  %v579 = vmul.f32 %v578, 1.442695
  %v580 = vpow.pop %v579
  %v581 = vadd.f32 %v580, 1.0
  %v582 = vrcp.pop %v581
  %v583 = vmul.f32 1.0, %v582
  %v584 = vtanh.pop %v577
  %v585 = vmul.f32 %v583, %v494
  %587 = vrot.lane.b32.xlu0 %v584, 64
  %v588 = vpop.permute.xlu0 %587
  %v590 = vmul.f32 %v583, %v588
  %592 = vrot.lane.b32.xlu0 %v590, 32
  %v593 = vpop.permute.xlu0 %592
  %v595 = vadd.f32 %v585, %v593
  %v596 = vtanh.pop %v595
  %598 = vrot.lane.b32.xlu0 %v596, 64
  %v599 = vpop.permute.xlu0 %598
  %v601 = vmul.f32 %v583, %v599
  %v602 = vld [vmem:[%s1 + $0x18] sm:$0xff]
  %vm603 = vcmp.gt.f32.partialorder %v602, 0.0
  %v604 = vsel %vm603, 1, 0
  %605 = vset.pattern.permute.xlu0 0
  %606 = vperm.xlu0 %605, %v604
  %v607 = vpop.permute.xlu0 %606
  %vm608 = vcmp.eq.s32.totalorder %v607, 1
  %v609 = vsel %vm608, %v601, %v493
  %v610 = vsel %vm608, %v595, %v494
  %v611 = vsel %vm608, %v601, 0.0
  %613 = vrot.lane.b32.xlu0 %v611, 32
  %v614 = vpop.permute.xlu0 %613
  %616 = vst.msk [vmem:[%s5 + $0x18] sm:$0xff] %vm148, %v614
  %v617 = vld [vmem:[#allocation2 + $0x20] sm:$0xff]
  %619 = vrot.lane.b32.xlu0 %v609, 32
  %v620 = vpop.permute.xlu0 %619
  %v621 = vsel %vm148, %v620, 0
  %623 = vmatprep.subr.mxu0 0.0
  %624 = vmatpush1.msra.mxu0 %v141
  %625 = vmatprep.subr.mxu0 0.0
  %626 = vmatpush1.msra.mxu0 %v142
  %627 = vmatprep.subr.mxu0 0.0
  %628 = vmatpush1.msra.mxu0 %v143
  %629 = vmatprep.subr.mxu0 0.0
  %630 = vmatpush1.msra.mxu0 %v144
  %631 = vmatprep.subr.mxu0 0.0
  %632 = vmatpush1.msra.mxu0 0.0
  %633 = vmatprep.subr.mxu0 0.0
  %634 = vmatpush1.msra.mxu0 0.0
  %635 = vmatprep.subr.mxu0 0.0
  %636 = vmatpush1.msra.mxu0 0.0
  %637 = vmatprep.subr.mxu0 0.0
  %638 = vmatpush1.msra.mxu0 0.0
  %639 = vmatprep.subr.mxu0 0.0
  %640 = vmatpush1.msra.mxu0 0.0
  %641 = vmatprep.subr.mxu0 0.0
  %642 = vmatpush1.msra.mxu0 0.0
  %643 = vmatprep.subr.mxu0 0.0
  %644 = vmatpush1.msra.mxu0 0.0
  %645 = vmatprep.subr.mxu0 0.0
  %646 = vmatpush1.msra.mxu0 0.0
  %647 = vmatprep.subr.mxu0 0.0
  %648 = vmatpush1.msra.mxu0 0.0
  %649 = vmatprep.subr.mxu0 0.0
  %650 = vmatpush1.msra.mxu0 0.0
  %651 = vmatprep.subr.mxu0 0.0
  %652 = vmatpush1.msra.mxu0 0.0
  %653 = vmatprep.subr.mxu0 0.0
  %654 = vmatpush1.msra.mxu0 0.0
  %655 = vmatprep.subr.mxu0 0.0
  %656 = vmatpush1.msra.mxu0 0.0
  %657 = vmatprep.subr.mxu0 0.0
  %658 = vmatpush1.msra.mxu0 0.0
  %659 = vmatprep.subr.mxu0 0.0
  %660 = vmatpush1.msra.mxu0 0.0
  %661 = vmatprep.subr.mxu0 0.0
  %662 = vmatpush1.msra.mxu0 0.0
  %663 = vmatprep.subr.mxu0 0.0
  %664 = vmatpush1.msra.mxu0 0.0
  %665 = vmatprep.subr.mxu0 0.0
  %666 = vmatpush1.msra.mxu0 0.0
  %667 = vmatprep.subr.mxu0 0.0
  %668 = vmatpush1.msra.mxu0 0.0
  %669 = vmatprep.subr.mxu0 0.0
  %670 = vmatpush1.msra.mxu0 0.0
  %671 = vmatprep.subr.mxu0 0.0
  %672 = vmatpush1.msra.mxu0 0.0
  %673 = vmatprep.subr.mxu0 0.0
  %674 = vmatpush1.msra.mxu0 0.0
  %675 = vmatprep.subr.mxu0 0.0
  %676 = vmatpush1.msra.mxu0 0.0
  %677 = vmatprep.subr.mxu0 0.0
  %678 = vmatpush1.msra.mxu0 0.0
  %679 = vmatprep.subr.mxu0 0.0
  %680 = vmatpush1.msra.mxu0 0.0
  %681 = vmatprep.subr.mxu0 0.0
  %682 = vmatpush1.msra.mxu0 0.0
  %683 = vmatprep.subr.mxu0 0.0
  %684 = vmatpush1.msra.mxu0 0.0
  %685 = vmatprep.subr.mxu0 0.0
  %686 = vmatpush1.msra.mxu0 0.0
  %687 = vmatprep.mubr.f32.mxu0 0.0
  %688 = vmatmul.mubr.f32.gmra.mrb[0].mxu0 %v621
  %v689 = vpop.f32.mrb[0].mxu0
  %v690 = vadd.f32 0.0, %v689
  %v691 = vpop.f32.mrb[0].mxu0
  %692 = vdwg.mxu0
  %v693 = vadd.f32 %v617, %v690
  %v694 = vxor.u32 %v693, 2147483648
  %v695 = vmul.f32 %v694, 1.442695
  %v696 = vpow.pop %v695
  %v697 = vadd.f32 %v696, 1.0
  %v698 = vrcp.pop %v697
  %v699 = vmul.f32 1.0, %v698
  %v700 = vtanh.pop %v693
  %v701 = vmul.f32 %v699, %v610
  %703 = vrot.lane.b32.xlu0 %v700, 64
  %v704 = vpop.permute.xlu0 %703
  %v706 = vmul.f32 %v699, %v704
  %708 = vrot.lane.b32.xlu0 %v706, 32
  %v709 = vpop.permute.xlu0 %708
  %v711 = vadd.f32 %v701, %v709
  %v712 = vtanh.pop %v711
  %714 = vrot.lane.b32.xlu0 %v712, 64
  %v715 = vpop.permute.xlu0 %714
  %v717 = vmul.f32 %v699, %v715
  %v718 = vld [vmem:[%s1 + $0x20] sm:$0xff]
  %vm719 = vcmp.gt.f32.partialorder %v718, 0.0
  %v720 = vsel %vm719, 1, 0
  %721 = vset.pattern.permute.xlu0 0
  %722 = vperm.xlu0 %721, %v720
  %v723 = vpop.permute.xlu0 %722
  %vm724 = vcmp.eq.s32.totalorder %v723, 1
  %v725 = vsel %vm724, %v717, %v609
  %v726 = vsel %vm724, %v711, %v610
  %v727 = vsel %vm724, %v717, 0.0
  %729 = vrot.lane.b32.xlu0 %v727, 32
  %v730 = vpop.permute.xlu0 %729
  %732 = vst.msk [vmem:[%s5 + $0x20] sm:$0xff] %vm148, %v730
  %v733 = vld [vmem:[#allocation2 + $0x28] sm:$0xff]
  %735 = vrot.lane.b32.xlu0 %v725, 32
  %v736 = vpop.permute.xlu0 %735
  %v737 = vsel %vm148, %v736, 0
  %739 = vmatprep.subr.mxu0 0.0
  %740 = vmatpush1.msra.mxu0 %v141
  %741 = vmatprep.subr.mxu0 0.0
  %742 = vmatpush1.msra.mxu0 %v142
  %743 = vmatprep.subr.mxu0 0.0
  %744 = vmatpush1.msra.mxu0 %v143
  %745 = vmatprep.subr.mxu0 0.0
  %746 = vmatpush1.msra.mxu0 %v144
  %747 = vmatprep.subr.mxu0 0.0
  %748 = vmatpush1.msra.mxu0 0.0
  %749 = vmatprep.subr.mxu0 0.0
  %750 = vmatpush1.msra.mxu0 0.0
  %751 = vmatprep.subr.mxu0 0.0
  %752 = vmatpush1.msra.mxu0 0.0
  %753 = vmatprep.subr.mxu0 0.0
  %754 = vmatpush1.msra.mxu0 0.0
  %755 = vmatprep.subr.mxu0 0.0
  %756 = vmatpush1.msra.mxu0 0.0
  %757 = vmatprep.subr.mxu0 0.0
  %758 = vmatpush1.msra.mxu0 0.0
  %759 = vmatprep.subr.mxu0 0.0
  %760 = vmatpush1.msra.mxu0 0.0
  %761 = vmatprep.subr.mxu0 0.0
  %762 = vmatpush1.msra.mxu0 0.0
  %763 = vmatprep.subr.mxu0 0.0
  %764 = vmatpush1.msra.mxu0 0.0
  %765 = vmatprep.subr.mxu0 0.0
  %766 = vmatpush1.msra.mxu0 0.0
  %767 = vmatprep.subr.mxu0 0.0
  %768 = vmatpush1.msra.mxu0 0.0
  %769 = vmatprep.subr.mxu0 0.0
  %770 = vmatpush1.msra.mxu0 0.0
  %771 = vmatprep.subr.mxu0 0.0
  %772 = vmatpush1.msra.mxu0 0.0
  %773 = vmatprep.subr.mxu0 0.0
  %774 = vmatpush1.msra.mxu0 0.0
  %775 = vmatprep.subr.mxu0 0.0
  %776 = vmatpush1.msra.mxu0 0.0
  %777 = vmatprep.subr.mxu0 0.0
  %778 = vmatpush1.msra.mxu0 0.0
  %779 = vmatprep.subr.mxu0 0.0
  %780 = vmatpush1.msra.mxu0 0.0
  %781 = vmatprep.subr.mxu0 0.0
  %782 = vmatpush1.msra.mxu0 0.0
  %783 = vmatprep.subr.mxu0 0.0
  %784 = vmatpush1.msra.mxu0 0.0
  %785 = vmatprep.subr.mxu0 0.0
  %786 = vmatpush1.msra.mxu0 0.0
  %787 = vmatprep.subr.mxu0 0.0
  %788 = vmatpush1.msra.mxu0 0.0
  %789 = vmatprep.subr.mxu0 0.0
  %790 = vmatpush1.msra.mxu0 0.0
  %791 = vmatprep.subr.mxu0 0.0
  %792 = vmatpush1.msra.mxu0 0.0
  %793 = vmatprep.subr.mxu0 0.0
  %794 = vmatpush1.msra.mxu0 0.0
  %795 = vmatprep.subr.mxu0 0.0
  %796 = vmatpush1.msra.mxu0 0.0
  %797 = vmatprep.subr.mxu0 0.0
  %798 = vmatpush1.msra.mxu0 0.0
  %799 = vmatprep.subr.mxu0 0.0
  %800 = vmatpush1.msra.mxu0 0.0
  %801 = vmatprep.subr.mxu0 0.0
  %802 = vmatpush1.msra.mxu0 0.0
  %803 = vmatprep.mubr.f32.mxu0 0.0
  %804 = vmatmul.mubr.f32.gmra.mrb[0].mxu0 %v737
  %v805 = vpop.f32.mrb[0].mxu0
  %v806 = vadd.f32 0.0, %v805
  %v807 = vpop.f32.mrb[0].mxu0
  %808 = vdwg.mxu0
  %v809 = vadd.f32 %v733, %v806
  %v810 = vxor.u32 %v809, 2147483648
  %v811 = vmul.f32 %v810, 1.442695
  %v812 = vpow.pop %v811
  %v813 = vadd.f32 %v812, 1.0
  %v814 = vrcp.pop %v813
  %v815 = vmul.f32 1.0, %v814
  %v816 = vtanh.pop %v809
  %v817 = vmul.f32 %v815, %v726
  %819 = vrot.lane.b32.xlu0 %v816, 64
  %v820 = vpop.permute.xlu0 %819
  %v822 = vmul.f32 %v815, %v820
  %824 = vrot.lane.b32.xlu0 %v822, 32
  %v825 = vpop.permute.xlu0 %824
  %v827 = vadd.f32 %v817, %v825
  %v828 = vtanh.pop %v827
  %830 = vrot.lane.b32.xlu0 %v828, 64
  %v831 = vpop.permute.xlu0 %830
  %v833 = vmul.f32 %v815, %v831
  %v834 = vld [vmem:[%s1 + $0x28] sm:$0xff]
  %vm835 = vcmp.gt.f32.partialorder %v834, 0.0
  %v836 = vsel %vm835, 1, 0
  %837 = vset.pattern.permute.xlu0 0
  %838 = vperm.xlu0 %837, %v836
  %v839 = vpop.permute.xlu0 %838
  %vm840 = vcmp.eq.s32.totalorder %v839, 1
  %v841 = vsel %vm840, %v833, %v725
  %v842 = vsel %vm840, %v827, %v726
  %v843 = vsel %vm840, %v833, 0.0
  %845 = vrot.lane.b32.xlu0 %v843, 32
  %v846 = vpop.permute.xlu0 %845
  %848 = vst.msk [vmem:[%s5 + $0x28] sm:$0xff] %vm148, %v846
  %v849 = vld [vmem:[#allocation2 + $0x30] sm:$0xff]
  %851 = vrot.lane.b32.xlu0 %v841, 32
  %v852 = vpop.permute.xlu0 %851
  %v853 = vsel %vm148, %v852, 0
  %855 = vmatprep.subr.mxu0 0.0
  %856 = vmatpush1.msra.mxu0 %v141
  %857 = vmatprep.subr.mxu0 0.0
  %858 = vmatpush1.msra.mxu0 %v142
  %859 = vmatprep.subr.mxu0 0.0
  %860 = vmatpush1.msra.mxu0 %v143
  %861 = vmatprep.subr.mxu0 0.0
  %862 = vmatpush1.msra.mxu0 %v144
  %863 = vmatprep.subr.mxu0 0.0
  %864 = vmatpush1.msra.mxu0 0.0
  %865 = vmatprep.subr.mxu0 0.0
  %866 = vmatpush1.msra.mxu0 0.0
  %867 = vmatprep.subr.mxu0 0.0
  %868 = vmatpush1.msra.mxu0 0.0
  %869 = vmatprep.subr.mxu0 0.0
  %870 = vmatpush1.msra.mxu0 0.0
  %871 = vmatprep.subr.mxu0 0.0
  %872 = vmatpush1.msra.mxu0 0.0
  %873 = vmatprep.subr.mxu0 0.0
  %874 = vmatpush1.msra.mxu0 0.0
  %875 = vmatprep.subr.mxu0 0.0
  %876 = vmatpush1.msra.mxu0 0.0
  %877 = vmatprep.subr.mxu0 0.0
  %878 = vmatpush1.msra.mxu0 0.0
  %879 = vmatprep.subr.mxu0 0.0
  %880 = vmatpush1.msra.mxu0 0.0
  %881 = vmatprep.subr.mxu0 0.0
  %882 = vmatpush1.msra.mxu0 0.0
  %883 = vmatprep.subr.mxu0 0.0
  %884 = vmatpush1.msra.mxu0 0.0
  %885 = vmatprep.subr.mxu0 0.0
  %886 = vmatpush1.msra.mxu0 0.0
  %887 = vmatprep.subr.mxu0 0.0
  %888 = vmatpush1.msra.mxu0 0.0
  %889 = vmatprep.subr.mxu0 0.0
  %890 = vmatpush1.msra.mxu0 0.0
  %891 = vmatprep.subr.mxu0 0.0
  %892 = vmatpush1.msra.mxu0 0.0
  %893 = vmatprep.subr.mxu0 0.0
  %894 = vmatpush1.msra.mxu0 0.0
  %895 = vmatprep.subr.mxu0 0.0
  %896 = vmatpush1.msra.mxu0 0.0
  %897 = vmatprep.subr.mxu0 0.0
  %898 = vmatpush1.msra.mxu0 0.0
  %899 = vmatprep.subr.mxu0 0.0
  %900 = vmatpush1.msra.mxu0 0.0
  %901 = vmatprep.subr.mxu0 0.0
  %902 = vmatpush1.msra.mxu0 0.0
  %903 = vmatprep.subr.mxu0 0.0
  %904 = vmatpush1.msra.mxu0 0.0
  %905 = vmatprep.subr.mxu0 0.0
  %906 = vmatpush1.msra.mxu0 0.0
  %907 = vmatprep.subr.mxu0 0.0
  %908 = vmatpush1.msra.mxu0 0.0
  %909 = vmatprep.subr.mxu0 0.0
  %910 = vmatpush1.msra.mxu0 0.0
  %911 = vmatprep.subr.mxu0 0.0
  %912 = vmatpush1.msra.mxu0 0.0
  %913 = vmatprep.subr.mxu0 0.0
  %914 = vmatpush1.msra.mxu0 0.0
  %915 = vmatprep.subr.mxu0 0.0
  %916 = vmatpush1.msra.mxu0 0.0
  %917 = vmatprep.subr.mxu0 0.0
  %918 = vmatpush1.msra.mxu0 0.0
  %919 = vmatprep.mubr.f32.mxu0 0.0
  %920 = vmatmul.mubr.f32.gmra.mrb[0].mxu0 %v853
  %v921 = vpop.f32.mrb[0].mxu0
  %v922 = vadd.f32 0.0, %v921
  %v923 = vpop.f32.mrb[0].mxu0
  %924 = vdwg.mxu0
  %v925 = vadd.f32 %v849, %v922
  %v926 = vxor.u32 %v925, 2147483648
  %v927 = vmul.f32 %v926, 1.442695
  %v928 = vpow.pop %v927
  %v929 = vadd.f32 %v928, 1.0
  %v930 = vrcp.pop %v929
  %v931 = vmul.f32 1.0, %v930
  %v932 = vtanh.pop %v925
  %v933 = vmul.f32 %v931, %v842
  %935 = vrot.lane.b32.xlu0 %v932, 64
  %v936 = vpop.permute.xlu0 %935
  %v938 = vmul.f32 %v931, %v936
  %940 = vrot.lane.b32.xlu0 %v938, 32
  %v941 = vpop.permute.xlu0 %940
  %v943 = vadd.f32 %v933, %v941
  %v944 = vtanh.pop %v943
  %946 = vrot.lane.b32.xlu0 %v944, 64
  %v947 = vpop.permute.xlu0 %946
  %v949 = vmul.f32 %v931, %v947
  %v950 = vld [vmem:[%s1 + $0x30] sm:$0xff]
  %vm951 = vcmp.gt.f32.partialorder %v950, 0.0
  %v952 = vsel %vm951, 1, 0
  %953 = vset.pattern.permute.xlu0 0
  %954 = vperm.xlu0 %953, %v952
  %v955 = vpop.permute.xlu0 %954
  %vm956 = vcmp.eq.s32.totalorder %v955, 1
  %v957 = vsel %vm956, %v949, %v841
  %v958 = vsel %vm956, %v943, %v842
  %v959 = vsel %vm956, %v949, 0.0
  %961 = vrot.lane.b32.xlu0 %v959, 32
  %v962 = vpop.permute.xlu0 %961
  %964 = vst.msk [vmem:[%s5 + $0x30] sm:$0xff] %vm148, %v962
  %v965 = vld [vmem:[#allocation2 + $0x38] sm:$0xff]
  %967 = vrot.lane.b32.xlu0 %v957, 32
  %v968 = vpop.permute.xlu0 %967
  %v969 = vsel %vm148, %v968, 0
  %971 = vmatprep.subr.mxu0 0.0
  %972 = vmatpush1.msra.mxu0 %v141
  %973 = vmatprep.subr.mxu0 0.0
  %974 = vmatpush1.msra.mxu0 %v142
  %975 = vmatprep.subr.mxu0 0.0
  %976 = vmatpush1.msra.mxu0 %v143
  %977 = vmatprep.subr.mxu0 0.0
  %978 = vmatpush1.msra.mxu0 %v144
  %979 = vmatprep.subr.mxu0 0.0
  %980 = vmatpush1.msra.mxu0 0.0
  %981 = vmatprep.subr.mxu0 0.0
  %982 = vmatpush1.msra.mxu0 0.0
  %983 = vmatprep.subr.mxu0 0.0
  %984 = vmatpush1.msra.mxu0 0.0
  %985 = vmatprep.subr.mxu0 0.0
  %986 = vmatpush1.msra.mxu0 0.0
  %987 = vmatprep.subr.mxu0 0.0
  %988 = vmatpush1.msra.mxu0 0.0
  %989 = vmatprep.subr.mxu0 0.0
  %990 = vmatpush1.msra.mxu0 0.0
  %991 = vmatprep.subr.mxu0 0.0
  %992 = vmatpush1.msra.mxu0 0.0
  %993 = vmatprep.subr.mxu0 0.0
  %994 = vmatpush1.msra.mxu0 0.0
  %995 = vmatprep.subr.mxu0 0.0
  %996 = vmatpush1.msra.mxu0 0.0
  %997 = vmatprep.subr.mxu0 0.0
  %998 = vmatpush1.msra.mxu0 0.0
  %999 = vmatprep.subr.mxu0 0.0
  %1000 = vmatpush1.msra.mxu0 0.0
  %1001 = vmatprep.subr.mxu0 0.0
  %1002 = vmatpush1.msra.mxu0 0.0
  %1003 = vmatprep.subr.mxu0 0.0
  %1004 = vmatpush1.msra.mxu0 0.0
  %1005 = vmatprep.subr.mxu0 0.0
  %1006 = vmatpush1.msra.mxu0 0.0
  %1007 = vmatprep.subr.mxu0 0.0
  %1008 = vmatpush1.msra.mxu0 0.0
  %1009 = vmatprep.subr.mxu0 0.0
  %1010 = vmatpush1.msra.mxu0 0.0
  %1011 = vmatprep.subr.mxu0 0.0
  %1012 = vmatpush1.msra.mxu0 0.0
  %1013 = vmatprep.subr.mxu0 0.0
  %1014 = vmatpush1.msra.mxu0 0.0
  %1015 = vmatprep.subr.mxu0 0.0
  %1016 = vmatpush1.msra.mxu0 0.0
  %1017 = vmatprep.subr.mxu0 0.0
  %1018 = vmatpush1.msra.mxu0 0.0
  %1019 = vmatprep.subr.mxu0 0.0
  %1020 = vmatpush1.msra.mxu0 0.0
  %1021 = vmatprep.subr.mxu0 0.0
  %1022 = vmatpush1.msra.mxu0 0.0
  %1023 = vmatprep.subr.mxu0 0.0
  %1024 = vmatpush1.msra.mxu0 0.0
  %1025 = vmatprep.subr.mxu0 0.0
  %1026 = vmatpush1.msra.mxu0 0.0
  %1027 = vmatprep.subr.mxu0 0.0
  %1028 = vmatpush1.msra.mxu0 0.0
  %1029 = vmatprep.subr.mxu0 0.0
  %1030 = vmatpush1.msra.mxu0 0.0
  %1031 = vmatprep.subr.mxu0 0.0
  %1032 = vmatpush1.msra.mxu0 0.0
  %1033 = vmatprep.subr.mxu0 0.0
  %1034 = vmatpush1.msra.mxu0 0.0
  %1035 = vmatprep.mubr.f32.mxu0 0.0
  %1036 = vmatmul.mubr.f32.gmra.mrb[0].mxu0 %v969
  %v1037 = vpop.f32.mrb[0].mxu0
  %v1038 = vadd.f32 0.0, %v1037
  %v1039 = vpop.f32.mrb[0].mxu0
  %1040 = vdwg.mxu0
  %v1041 = vadd.f32 %v965, %v1038
  %v1042 = vxor.u32 %v1041, 2147483648
  %v1043 = vmul.f32 %v1042, 1.442695
  %v1044 = vpow.pop %v1043
  %v1045 = vadd.f32 %v1044, 1.0
  %v1046 = vrcp.pop %v1045
  %v1047 = vmul.f32 1.0, %v1046
  %v1048 = vtanh.pop %v1041
  %v1049 = vmul.f32 %v1047, %v958
  %1051 = vrot.lane.b32.xlu0 %v1048, 64
  %v1052 = vpop.permute.xlu0 %1051
  %v1054 = vmul.f32 %v1047, %v1052
  %1056 = vrot.lane.b32.xlu0 %v1054, 32
  %v1057 = vpop.permute.xlu0 %1056
  %v1059 = vadd.f32 %v1049, %v1057
  %v1060 = vtanh.pop %v1059
  %1062 = vrot.lane.b32.xlu0 %v1060, 64
  %v1063 = vpop.permute.xlu0 %1062
  %v1065 = vmul.f32 %v1047, %v1063
  %v1066 = vld [vmem:[%s1 + $0x38] sm:$0xff]
  %vm1067 = vcmp.gt.f32.partialorder %v1066, 0.0
  %v1068 = vsel %vm1067, 1, 0
  %1069 = vset.pattern.permute.xlu0 0
  %1070 = vperm.xlu0 %1069, %v1068
  %v1071 = vpop.permute.xlu0 %1070
  %vm1072 = vcmp.eq.s32.totalorder %v1071, 1
  %v1073 = vsel %vm1072, %v1065, %v957
  %v1074 = vsel %vm1072, %v1059, %v958
  %v1075 = vsel %vm1072, %v1065, 0.0
  %1077 = vrot.lane.b32.xlu0 %v1075, 32
  %v1078 = vpop.permute.xlu0 %1077
  %1080 = vst.msk [vmem:[%s5 + $0x38] sm:$0xff] %vm148, %v1078
  %1082 = vrot.lane.b32.xlu0 %v1073, 32
  %v1083 = vpop.permute.xlu0 %1082
  %1085 = vst.msk [vmem:[#allocation3] sm:$0xff] %vm148, %v1083
  %1087 = vrot.lane.b32.xlu0 %v1074, 96
  %v1088 = vpop.permute.xlu0 %1087
  %1090 = vst.msk [vmem:[#allocation4] sm:$0xff] %vm148, %v1088
  // Predicated region
  $region26: #{batch_rnn_forward.3} parent=0 // pred_check
    _
  $region27: #{batch_rnn_forward.3} parent=0 // pred_check_branch
    %1092 = sbr.rel (0) target = $region29
  $region28: #{batch_rnn_forward.3} parent=0 // pred_region
    _
  $region29: #{batch_rnn_forward.3} parent=0 // pred_fallthru
    _
  // Predicated region
  $region30: #{batch_rnn_forward.3} parent=0 // pred_check
    _
  $region31: #{batch_rnn_forward.3} parent=0 // pred_check_branch
    %1094 = sbr.rel (0) target = $region33
  $region32: #{batch_rnn_forward.3} parent=0 // pred_region
    _
  $region33: #{batch_rnn_forward.3} parent=0 // pred_fallthru
    _

</llo_original>
